<compile_context>
chip_gen: v7x
topology: tpu7x:2x2x1
jax: 0.10.0
libtpu: 0.0.40
codegen_flags: <defaults>
</compile_context>

<pallas_src>
import math
import functools

import numpy as np
import jax
import jax.numpy as jnp
from jax.experimental import pallas as pl


# ----------------------------------------------------------------------------
# Fused kernel: c_attn -> per-head causal softmax attention -> c_proj
# ----------------------------------------------------------------------------
def _fused_causal_attn_kernel(x_ref, w_qkv_ref, b_qkv_ref, w_proj_ref,
                              b_proj_ref, bias_ref, o_ref,
                              *, n_head, head_dim):
    """Whole CausalSelfAttention forward on VMEM-resident data.

    x_ref      : (N, C)   flattened (B*T, C) activations
    w_qkv_ref  : (C, 3C)  c_attn weight, stored (in, out)
    b_qkv_ref  : (1, 3C)  c_attn bias
    w_proj_ref : (C, C)   c_proj weight, stored (in, out)
    b_proj_ref : (1, C)   c_proj bias
    bias_ref   : (N, N)   additive mask: 0 where attending is allowed,
                          -1e30 elsewhere (causal + same-batch block diagonal)
    o_ref      : (N, C)   output
    """
    N = x_ref.shape[0]
    C = n_head * head_dim
    scale = 1.0 / math.sqrt(head_dim)

    x = x_ref[...]                                              # (N, C)

    # --- c_attn: one fused QKV projection (single MXU pass over x) ----------
    qkv = jnp.dot(x, w_qkv_ref[...], preferred_element_type=jnp.float32)
    qkv = qkv + b_qkv_ref[...].astype(jnp.float32)              # (N, 3C)

    mask_bias = bias_ref[...]                                   # (N, N), shared by all heads
    w_proj = w_proj_ref[...]                                    # (C, C)

    acc = jnp.zeros((N, C), jnp.float32)
    for h in range(n_head):                                     # H=4, tiny static loop
        lo = h * head_dim
        hi = lo + head_dim
        q_h = qkv[:, lo:hi]                                     # (N, D)
        k_h = qkv[:, C + lo:C + hi]                             # (N, D)
        v_h = qkv[:, 2 * C + lo:2 * C + hi]                     # (N, D)

        # scores: contract the last dims directly -> no explicit k.T
        s = jax.lax.dot_general(q_h, k_h, (((1,), (1,)), ((), ())),
                                preferred_element_type=jnp.float32)
        s = s * scale + mask_bias                               # (N, N)

        # softmax (masked entries underflow to exactly 0 after exp)
        m = jnp.max(s, axis=-1, keepdims=True)
        p = jnp.exp(s - m)
        denom = jnp.sum(p, axis=-1, keepdims=True)
        # un-normalized P @ V, then fold 1/denom into the small (N, D) result.
        # (pl.reciprocal(denom, approx=True) would move this onto the EUP slot;
        #  kept exact so the f32 check vs. the XLA reference stays tight.)
        y_h = jnp.dot(p, v_h, preferred_element_type=jnp.float32) / denom

        # head-merge + c_proj fused: y @ W == sum_h y_h @ W[h*D:(h+1)*D, :]
        acc = acc + jnp.dot(y_h, w_proj[lo:hi, :],
                            preferred_element_type=jnp.float32)

    out = acc + b_proj_ref[...].astype(jnp.float32)
    o_ref[...] = out.astype(o_ref.dtype)                        # single lane-dense store


# ----------------------------------------------------------------------------
# Host-side helpers / wrapper
# ----------------------------------------------------------------------------
def _causal_mask_bias(batch, seq_len, dtype=np.float32):
    """Additive bias (N, N): 0 where row may attend to col, -1e30 elsewhere."""
    n = batch * seq_len
    r = np.arange(n)
    same_batch = (r[:, None] // seq_len) == (r[None, :] // seq_len)
    causal = (r[None, :] % seq_len) <= (r[:, None] % seq_len)
    allowed = same_batch & causal
    return np.where(allowed, 0.0, -1e30).astype(dtype)


def causal_self_attention(x, params, n_head):
    """Forward pass equivalent to CausalSelfAttention.forward (eval mode)."""
    B, T, C = x.shape
    D = C // n_head
    N = B * T

    x2 = x.reshape(N, C)                               # free reshape; lane-dense layout
    mask_bias = jnp.asarray(_causal_mask_bias(B, T))   # host-precomputed constant

    kernel = functools.partial(_fused_causal_attn_kernel,
                               n_head=n_head, head_dim=D)

    def full(shape):
        return pl.BlockSpec(shape, lambda: (0,) * len(shape))

    out = pl.pallas_call(
        kernel,
        out_shape=jax.ShapeDtypeStruct((N, C), x.dtype),
        in_specs=[
            full((N, C)),          # x
            full((C, 3 * C)),      # W_attn (in, out)
            full((1, 3 * C)),      # b_attn
            full((C, C)),          # W_proj (in, out)
            full((1, C)),          # b_proj
            full((N, N)),          # additive causal mask
        ],
        out_specs=full((N, C)),
    )(x2,
      params["w_attn_t"], params["b_attn"].reshape(1, 3 * C),
      params["w_proj_t"], params["b_proj"].reshape(1, C),
      mask_bias)
    # TODO(synk): attn_dropout / resid_dropout are identities (dropout=0.0, eval mode).
    return out.reshape(B, T, C)


# ----------------------------------------------------------------------------
# Pure-JAX reference (sanity check)
# ----------------------------------------------------------------------------
def reference(x, params, n_head):
    B, T, C = x.shape
    D = C // n_head
    qkv = x @ params["w_attn_t"] + params["b_attn"]
    q, k, v = jnp.split(qkv, 3, axis=-1)

    def to_heads(t):
        return t.reshape(B, T, n_head, D).transpose(0, 2, 1, 3)

    q, k, v = to_heads(q), to_heads(k), to_heads(v)
    s = jnp.einsum("bhqd,bhkd->bhqk", q, k) / math.sqrt(D)
    mask = jnp.tril(jnp.ones((T, T), dtype=bool))
    s = jnp.where(mask[None, None], s, -jnp.inf)
    p = jax.nn.softmax(s, axis=-1)
    y = jnp.einsum("bhqk,bhkd->bhqd", p, v)
    y = y.transpose(0, 2, 1, 3).reshape(B, T, C)
    return y @ params["w_proj_t"] + params["b_proj"]


# ----------------------------------------------------------------------------
# Main
# ----------------------------------------------------------------------------
if __name__ == "__main__":
    # config: embedding_size=32, n_head=4, bias=True, dropout=0.0, block_size>=T
    B, T, C, n_head = 2, 8, 32, 4

    key = jax.random.PRNGKey(0)
    kx, kw1, kb1, kw2, kb2 = jax.random.split(key, 5)

    # deterministic init (PyTorch nn.Linear-style uniform bounds)
    bound1 = 1.0 / math.sqrt(C)
    params = {
        # stored already transposed to (in, out)
        "w_attn_t": jax.random.uniform(kw1, (C, 3 * C), jnp.float32, -bound1, bound1),
        "b_attn":   jax.random.uniform(kb1, (3 * C,),   jnp.float32, -bound1, bound1),
        "w_proj_t": jax.random.uniform(kw2, (C, C),     jnp.float32, -bound1, bound1),
        "b_proj":   jax.random.uniform(kb2, (C,),       jnp.float32, -bound1, bound1),
    }
    x = jax.random.normal(kx, (B, T, C), jnp.float32)

    y = causal_self_attention(x, params, n_head)
    y = jax.block_until_ready(y)

    y_ref = reference(x, params, n_head)
    assert y.shape == (B, T, C)
    assert jnp.allclose(y, y_ref, atol=1e-4, rtol=1e-4), "mismatch vs reference"

    print("KERNEL_OK")
</pallas_src>

<mosaic_0001>
module attributes {stable_mosaic.version = 11 : i64} {
  func.func @_fused_causal_attn_kernel(%arg0: memref<16x32xf32, #tpu.memory_space<vmem>>, %arg1: memref<32x96xf32, #tpu.memory_space<vmem>>, %arg2: memref<1x96xf32, #tpu.memory_space<vmem>>, %arg3: memref<32x32xf32, #tpu.memory_space<vmem>>, %arg4: memref<1x32xf32, #tpu.memory_space<vmem>>, %arg5: memref<16x16xf32, #tpu.memory_space<vmem>>, %arg6: memref<16x32xf32, #tpu.memory_space<vmem>>) attributes {dimension_semantics = [], scalar_prefetch = 0 : i64, scratch_operands = 0 : i64, tpu.core_type = #tpu.core_type<tc>} {
    %c0 = arith.constant 0 : index
    %c0_0 = arith.constant 0 : index
    %0 = vector.load %arg0[%c0, %c0_0] : memref<16x32xf32, #tpu.memory_space<vmem>>, vector<16x32xf32>
    %c0_1 = arith.constant 0 : index
    %c0_2 = arith.constant 0 : index
    %1 = vector.load %arg1[%c0_1, %c0_2] : memref<32x96xf32, #tpu.memory_space<vmem>>, vector<32x96xf32>
    %cst = arith.constant dense<0.000000e+00> : vector<16x96xf32>
    %2 = tpu.matmul %0, %1, %cst {dimension_numbers = #tpu.dot_dimension_numbers<[1], [0], [0], [1], [0, 0, 1, 1], [], []>} : vector<16x32xf32>, vector<32x96xf32>, vector<16x96xf32> -> vector<16x96xf32>
    %c0_3 = arith.constant 0 : index
    %c0_4 = arith.constant 0 : index
    %3 = vector.load %arg2[%c0_3, %c0_4] : memref<1x96xf32, #tpu.memory_space<vmem>>, vector<1x96xf32>
    %4 = vector.broadcast %3 : vector<1x96xf32> to vector<16x96xf32>
    %5 = arith.addf %2, %4 : vector<16x96xf32>
    %c0_5 = arith.constant 0 : index
    %c0_6 = arith.constant 0 : index
    %6 = vector.load %arg5[%c0_5, %c0_6] : memref<16x16xf32, #tpu.memory_space<vmem>>, vector<16x16xf32>
    %c0_7 = arith.constant 0 : index
    %c0_8 = arith.constant 0 : index
    %7 = vector.load %arg3[%c0_7, %c0_8] : memref<32x32xf32, #tpu.memory_space<vmem>>, vector<32x32xf32>
    %cst_9 = arith.constant 0.000000e+00 : f32
    %8 = vector.broadcast %cst_9 : f32 to vector<16x32xf32>
    %9 = vector.extract_strided_slice %5 {offsets = [0, 0], sizes = [16, 8], strides = [1, 1]} : vector<16x96xf32> to vector<16x8xf32>
    %10 = vector.extract_strided_slice %5 {offsets = [0, 32], sizes = [16, 8], strides = [1, 1]} : vector<16x96xf32> to vector<16x8xf32>
    %11 = vector.extract_strided_slice %5 {offsets = [0, 64], sizes = [16, 8], strides = [1, 1]} : vector<16x96xf32> to vector<16x8xf32>
    %cst_10 = arith.constant dense<0.000000e+00> : vector<16x16xf32>
    %12 = tpu.matmul %9, %10, %cst_10 {dimension_numbers = #tpu.dot_dimension_numbers<[1], [1], [0], [0], [0, 0, 1, 0], [], []>} : vector<16x8xf32>, vector<16x8xf32>, vector<16x16xf32> -> vector<16x16xf32>
    %cst_11 = arith.constant 0.353553385 : f32
    %13 = vector.broadcast %cst_11 : f32 to vector<16x16xf32>
    %14 = arith.mulf %12, %13 : vector<16x16xf32>
    %15 = arith.addf %14, %6 : vector<16x16xf32>
    %cst_12 = arith.constant dense<0xFF800000> : vector<16xf32>
    %16 = vector.multi_reduction <maximumf>, %15, %cst_12 [1] : vector<16x16xf32> to vector<16xf32>
    %17 = vector.shape_cast %16 : vector<16xf32> to vector<16x1xf32>
    %18 = vector.broadcast %17 : vector<16x1xf32> to vector<16x16xf32>
    %19 = arith.subf %15, %18 : vector<16x16xf32>
    %20 = math.exp %19 : vector<16x16xf32>
    %cst_13 = arith.constant dense<0.000000e+00> : vector<16xf32>
    %21 = vector.multi_reduction <add>, %20, %cst_13 [1] : vector<16x16xf32> to vector<16xf32>
    %22 = vector.shape_cast %21 : vector<16xf32> to vector<16x1xf32>
    %cst_14 = arith.constant dense<0.000000e+00> : vector<16x8xf32>
    %23 = tpu.matmul %20, %11, %cst_14 {dimension_numbers = #tpu.dot_dimension_numbers<[1], [0], [0], [1], [0, 0, 1, 1], [], []>} : vector<16x16xf32>, vector<16x8xf32>, vector<16x8xf32> -> vector<16x8xf32>
    %24 = vector.broadcast %22 : vector<16x1xf32> to vector<16x8xf32>
    %25 = arith.divf %23, %24 : vector<16x8xf32>
    %26 = vector.extract_strided_slice %7 {offsets = [0, 0], sizes = [8, 32], strides = [1, 1]} : vector<32x32xf32> to vector<8x32xf32>
    %cst_15 = arith.constant dense<0.000000e+00> : vector<16x32xf32>
    %27 = tpu.matmul %25, %26, %cst_15 {dimension_numbers = #tpu.dot_dimension_numbers<[1], [0], [0], [1], [0, 0, 1, 1], [], []>} : vector<16x8xf32>, vector<8x32xf32>, vector<16x32xf32> -> vector<16x32xf32>
    %28 = arith.addf %8, %27 : vector<16x32xf32>
    %29 = vector.extract_strided_slice %5 {offsets = [0, 8], sizes = [16, 8], strides = [1, 1]} : vector<16x96xf32> to vector<16x8xf32>
    %30 = vector.extract_strided_slice %5 {offsets = [0, 40], sizes = [16, 8], strides = [1, 1]} : vector<16x96xf32> to vector<16x8xf32>
    %31 = vector.extract_strided_slice %5 {offsets = [0, 72], sizes = [16, 8], strides = [1, 1]} : vector<16x96xf32> to vector<16x8xf32>
    %cst_16 = arith.constant dense<0.000000e+00> : vector<16x16xf32>
    %32 = tpu.matmul %29, %30, %cst_16 {dimension_numbers = #tpu.dot_dimension_numbers<[1], [1], [0], [0], [0, 0, 1, 0], [], []>} : vector<16x8xf32>, vector<16x8xf32>, vector<16x16xf32> -> vector<16x16xf32>
    %cst_17 = arith.constant 0.353553385 : f32
    %33 = vector.broadcast %cst_17 : f32 to vector<16x16xf32>
    %34 = arith.mulf %32, %33 : vector<16x16xf32>
    %35 = arith.addf %34, %6 : vector<16x16xf32>
    %cst_18 = arith.constant dense<0xFF800000> : vector<16xf32>
    %36 = vector.multi_reduction <maximumf>, %35, %cst_18 [1] : vector<16x16xf32> to vector<16xf32>
    %37 = vector.shape_cast %36 : vector<16xf32> to vector<16x1xf32>
    %38 = vector.broadcast %37 : vector<16x1xf32> to vector<16x16xf32>
    %39 = arith.subf %35, %38 : vector<16x16xf32>
    %40 = math.exp %39 : vector<16x16xf32>
    %cst_19 = arith.constant dense<0.000000e+00> : vector<16xf32>
    %41 = vector.multi_reduction <add>, %40, %cst_19 [1] : vector<16x16xf32> to vector<16xf32>
    %42 = vector.shape_cast %41 : vector<16xf32> to vector<16x1xf32>
    %cst_20 = arith.constant dense<0.000000e+00> : vector<16x8xf32>
    %43 = tpu.matmul %40, %31, %cst_20 {dimension_numbers = #tpu.dot_dimension_numbers<[1], [0], [0], [1], [0, 0, 1, 1], [], []>} : vector<16x16xf32>, vector<16x8xf32>, vector<16x8xf32> -> vector<16x8xf32>
    %44 = vector.broadcast %42 : vector<16x1xf32> to vector<16x8xf32>
    %45 = arith.divf %43, %44 : vector<16x8xf32>
    %46 = vector.extract_strided_slice %7 {offsets = [8, 0], sizes = [8, 32], strides = [1, 1]} : vector<32x32xf32> to vector<8x32xf32>
    %cst_21 = arith.constant dense<0.000000e+00> : vector<16x32xf32>
    %47 = tpu.matmul %45, %46, %cst_21 {dimension_numbers = #tpu.dot_dimension_numbers<[1], [0], [0], [1], [0, 0, 1, 1], [], []>} : vector<16x8xf32>, vector<8x32xf32>, vector<16x32xf32> -> vector<16x32xf32>
    %48 = arith.addf %28, %47 : vector<16x32xf32>
    %49 = vector.extract_strided_slice %5 {offsets = [0, 16], sizes = [16, 8], strides = [1, 1]} : vector<16x96xf32> to vector<16x8xf32>
    %50 = vector.extract_strided_slice %5 {offsets = [0, 48], sizes = [16, 8], strides = [1, 1]} : vector<16x96xf32> to vector<16x8xf32>
    %51 = vector.extract_strided_slice %5 {offsets = [0, 80], sizes = [16, 8], strides = [1, 1]} : vector<16x96xf32> to vector<16x8xf32>
    %cst_22 = arith.constant dense<0.000000e+00> : vector<16x16xf32>
    %52 = tpu.matmul %49, %50, %cst_22 {dimension_numbers = #tpu.dot_dimension_numbers<[1], [1], [0], [0], [0, 0, 1, 0], [], []>} : vector<16x8xf32>, vector<16x8xf32>, vector<16x16xf32> -> vector<16x16xf32>
    %cst_23 = arith.constant 0.353553385 : f32
    %53 = vector.broadcast %cst_23 : f32 to vector<16x16xf32>
    %54 = arith.mulf %52, %53 : vector<16x16xf32>
    %55 = arith.addf %54, %6 : vector<16x16xf32>
    %cst_24 = arith.constant dense<0xFF800000> : vector<16xf32>
    %56 = vector.multi_reduction <maximumf>, %55, %cst_24 [1] : vector<16x16xf32> to vector<16xf32>
    %57 = vector.shape_cast %56 : vector<16xf32> to vector<16x1xf32>
    %58 = vector.broadcast %57 : vector<16x1xf32> to vector<16x16xf32>
    %59 = arith.subf %55, %58 : vector<16x16xf32>
    %60 = math.exp %59 : vector<16x16xf32>
    %cst_25 = arith.constant dense<0.000000e+00> : vector<16xf32>
    %61 = vector.multi_reduction <add>, %60, %cst_25 [1] : vector<16x16xf32> to vector<16xf32>
    %62 = vector.shape_cast %61 : vector<16xf32> to vector<16x1xf32>
    %cst_26 = arith.constant dense<0.000000e+00> : vector<16x8xf32>
    %63 = tpu.matmul %60, %51, %cst_26 {dimension_numbers = #tpu.dot_dimension_numbers<[1], [0], [0], [1], [0, 0, 1, 1], [], []>} : vector<16x16xf32>, vector<16x8xf32>, vector<16x8xf32> -> vector<16x8xf32>
    %64 = vector.broadcast %62 : vector<16x1xf32> to vector<16x8xf32>
    %65 = arith.divf %63, %64 : vector<16x8xf32>
    %66 = vector.extract_strided_slice %7 {offsets = [16, 0], sizes = [8, 32], strides = [1, 1]} : vector<32x32xf32> to vector<8x32xf32>
    %cst_27 = arith.constant dense<0.000000e+00> : vector<16x32xf32>
    %67 = tpu.matmul %65, %66, %cst_27 {dimension_numbers = #tpu.dot_dimension_numbers<[1], [0], [0], [1], [0, 0, 1, 1], [], []>} : vector<16x8xf32>, vector<8x32xf32>, vector<16x32xf32> -> vector<16x32xf32>
    %68 = arith.addf %48, %67 : vector<16x32xf32>
    %69 = vector.extract_strided_slice %5 {offsets = [0, 24], sizes = [16, 8], strides = [1, 1]} : vector<16x96xf32> to vector<16x8xf32>
    %70 = vector.extract_strided_slice %5 {offsets = [0, 56], sizes = [16, 8], strides = [1, 1]} : vector<16x96xf32> to vector<16x8xf32>
    %71 = vector.extract_strided_slice %5 {offsets = [0, 88], sizes = [16, 8], strides = [1, 1]} : vector<16x96xf32> to vector<16x8xf32>
    %cst_28 = arith.constant dense<0.000000e+00> : vector<16x16xf32>
    %72 = tpu.matmul %69, %70, %cst_28 {dimension_numbers = #tpu.dot_dimension_numbers<[1], [1], [0], [0], [0, 0, 1, 0], [], []>} : vector<16x8xf32>, vector<16x8xf32>, vector<16x16xf32> -> vector<16x16xf32>
    %cst_29 = arith.constant 0.353553385 : f32
    %73 = vector.broadcast %cst_29 : f32 to vector<16x16xf32>
    %74 = arith.mulf %72, %73 : vector<16x16xf32>
    %75 = arith.addf %74, %6 : vector<16x16xf32>
    %cst_30 = arith.constant dense<0xFF800000> : vector<16xf32>
    %76 = vector.multi_reduction <maximumf>, %75, %cst_30 [1] : vector<16x16xf32> to vector<16xf32>
    %77 = vector.shape_cast %76 : vector<16xf32> to vector<16x1xf32>
    %78 = vector.broadcast %77 : vector<16x1xf32> to vector<16x16xf32>
    %79 = arith.subf %75, %78 : vector<16x16xf32>
    %80 = math.exp %79 : vector<16x16xf32>
    %cst_31 = arith.constant dense<0.000000e+00> : vector<16xf32>
    %81 = vector.multi_reduction <add>, %80, %cst_31 [1] : vector<16x16xf32> to vector<16xf32>
    %82 = vector.shape_cast %81 : vector<16xf32> to vector<16x1xf32>
    %cst_32 = arith.constant dense<0.000000e+00> : vector<16x8xf32>
    %83 = tpu.matmul %80, %71, %cst_32 {dimension_numbers = #tpu.dot_dimension_numbers<[1], [0], [0], [1], [0, 0, 1, 1], [], []>} : vector<16x16xf32>, vector<16x8xf32>, vector<16x8xf32> -> vector<16x8xf32>
    %84 = vector.broadcast %82 : vector<16x1xf32> to vector<16x8xf32>
    %85 = arith.divf %83, %84 : vector<16x8xf32>
    %86 = vector.extract_strided_slice %7 {offsets = [24, 0], sizes = [8, 32], strides = [1, 1]} : vector<32x32xf32> to vector<8x32xf32>
    %cst_33 = arith.constant dense<0.000000e+00> : vector<16x32xf32>
    %87 = tpu.matmul %85, %86, %cst_33 {dimension_numbers = #tpu.dot_dimension_numbers<[1], [0], [0], [1], [0, 0, 1, 1], [], []>} : vector<16x8xf32>, vector<8x32xf32>, vector<16x32xf32> -> vector<16x32xf32>
    %88 = arith.addf %68, %87 : vector<16x32xf32>
    %c0_34 = arith.constant 0 : index
    %c0_35 = arith.constant 0 : index
    %89 = vector.load %arg4[%c0_34, %c0_35] : memref<1x32xf32, #tpu.memory_space<vmem>>, vector<1x32xf32>
    %90 = vector.broadcast %89 : vector<1x32xf32> to vector<16x32xf32>
    %91 = arith.addf %88, %90 : vector<16x32xf32>
    %c0_36 = arith.constant 0 : index
    %c0_37 = arith.constant 0 : index
    %92 = vector.load %arg6[%c0_36, %c0_37] : memref<16x32xf32, #tpu.memory_space<vmem>>, vector<16x32xf32>
    tpu.vector_store %arg6[%c0_36, %c0_37], %91 {strides = array<i32>} : memref<16x32xf32, #tpu.memory_space<vmem>>, vector<16x32xf32>,
    return
  }
}

</mosaic_0001>

<llo_original>
// kernel: tpu_custom_call.1
$region0: #{tpu_custom_call.1}
  #allocation0 [shape = 'u32[]', space=smem, size = 0x4, offset = 0x4, fixed_abs, tag = 'smem constant byte address 0x4 - core index']
  #allocation1 [shape = 'u32[144,128]{1,0:T(1,128)}', space=vmem, size = 0x12000, scoped, tag = 'internal scratch']
  %s0 = inlined_call_operand.hbm [shape: f32[16,32], index: 0, kind: input, shape index: {}]
  %s1 = inlined_call_operand.hbm [shape: f32[32,96], index: 1, kind: input, shape index: {}]
  %s2 = inlined_call_operand.vmem [shape: f32[1,96], index: 2, kind: input, shape index: {}]
  %s3 = inlined_call_operand.hbm [shape: f32[32,32], index: 3, kind: input, shape index: {}]
  %s4 = inlined_call_operand.vmem [shape: f32[1,32], index: 4, kind: input, shape index: {}]
  %s5 = inlined_call_operand.vmem [shape: f32[16,16], index: 5, kind: input, shape index: {}]
  %s6 = inlined_call_operand.hbm [shape: f32[16,32], index: 6, kind: output, shape index: {}]
  %s7 = sld [smem:[#allocation0]]
  $region46: #{tpu_custom_call.1} parent=0
    _
  %s9 = ssub.s32 1, %s7
  %s10 = scalar_select 0, %s9, %s7
  $region1: #{tpu_custom_call.1} parent=0
    #allocation2 [shape = 'u8[8192]{0}', space=vmem, size = 0x2000, scoped, tag = 'input window, operand 0, single buffered']
    #allocation3 [shape = 's32[1]{0}', space=sflag, size = 0x4, scoped, tag = 'scoped memory for tpu_custom_call.1']
    #allocation4 [shape = 's32[1]{0}', space=sflag, size = 0x4, scoped, tag = 'scoped memory for tpu_custom_call.1']
    #allocation5 [shape = 'u8[16384]{0}', space=vmem, size = 0x4000, scoped, tag = 'input window, operand 1, single buffered']
    #allocation6 [shape = 's32[1]{0}', space=sflag, size = 0x4, scoped, tag = 'scoped memory for tpu_custom_call.1']
    #allocation7 [shape = 'u8[16384]{0}', space=vmem, size = 0x4000, scoped, tag = 'input window, operand 3, single buffered']
    #allocation8 [shape = 'u8[8192]{0}', space=vmem, size = 0x2000, scoped, tag = 'output window, operand 0, single buffered']
    %11 = vsyncpa [#allocation3], 0
    %12 = vsyncpa [#allocation6], 0
    %13 = vsyncpa [#allocation4], 0
    // Predicated region
    $region2: #{tpu_custom_call.1} parent=1 // pred_check
      _
    $region3: #{tpu_custom_call.1} parent=1 // pred_check_branch
      %15 = sbr.rel (0) target = $region5
    $region4: #{tpu_custom_call.1} parent=1 // pred_region
      %s17 = ssub.s32 256, 256
      %18 = vsyncadd [#allocation3], %s17
      %s19 = sshll.u32 [#allocation2], 4
      %s20 = int_to_ptr.vmem [resolvable:$true] %s19
      %25 = dma.hbm_to_vmem [thread:$0]  %s0, 256, %s20, [#allocation3], 128, 128, 8
    $region5: #{tpu_custom_call.1} parent=1 // pred_fallthru
      _
    // Predicated region
    $region6: #{tpu_custom_call.1} parent=1 // pred_check
      _
    $region7: #{tpu_custom_call.1} parent=1 // pred_check_branch
      %27 = sbr.rel (0) target = $region9
    $region8: #{tpu_custom_call.1} parent=1 // pred_region
      %s29 = ssub.s32 512, 512
      %30 = vsyncadd [#allocation6], %s29
      %s31 = sshll.u32 [#allocation5], 4
      %s32 = int_to_ptr.vmem [resolvable:$true] %s31
      %37 = dma.hbm_to_vmem [thread:$0]  %s1, 512, %s32, [#allocation6], 128, 128, 8
    $region9: #{tpu_custom_call.1} parent=1 // pred_fallthru
      _
    // Predicated region
    $region10: #{tpu_custom_call.1} parent=1 // pred_check
      _
    $region11: #{tpu_custom_call.1} parent=1 // pred_check_branch
      %39 = sbr.rel (0) target = $region13
    $region12: #{tpu_custom_call.1} parent=1 // pred_region
      _
    $region13: #{tpu_custom_call.1} parent=1 // pred_fallthru
      _
    // Predicated region
    $region14: #{tpu_custom_call.1} parent=1 // pred_check
      _
    $region15: #{tpu_custom_call.1} parent=1 // pred_check_branch
      %41 = sbr.rel (0) target = $region17
    $region16: #{tpu_custom_call.1} parent=1 // pred_region
      %s43 = ssub.s32 512, 512
      %44 = vsyncadd [#allocation6], %s43
      %s45 = sshll.u32 [#allocation7], 4
      %s46 = int_to_ptr.vmem [resolvable:$true] %s45
      %51 = dma.hbm_to_vmem [thread:$0]  %s3, 512, %s46, [#allocation6], 128, 128, 8
    $region17: #{tpu_custom_call.1} parent=1 // pred_fallthru
      _
    // Predicated region
    $region18: #{tpu_custom_call.1} parent=1 // pred_check
      _
    $region19: #{tpu_custom_call.1} parent=1 // pred_check_branch
      %53 = sbr.rel (0) target = $region21
    $region20: #{tpu_custom_call.1} parent=1 // pred_region
      _
    $region21: #{tpu_custom_call.1} parent=1 // pred_fallthru
      _
    // Predicated region
    $region22: #{tpu_custom_call.1} parent=1 // pred_check
      _
    $region23: #{tpu_custom_call.1} parent=1 // pred_check_branch
      %55 = sbr.rel (0) target = $region25
    $region24: #{tpu_custom_call.1} parent=1 // pred_region
      _
    $region25: #{tpu_custom_call.1} parent=1 // pred_fallthru
      _
    // Predicated region
    $region26: #{tpu_custom_call.1} parent=1 // pred_check
      _
    $region27: #{tpu_custom_call.1} parent=1 // pred_check_branch
      %57 = sbr.rel (0) target = $region29
    $region28: #{tpu_custom_call.1} parent=1 // pred_region
      %58 = dma.done [#allocation3], 256
    $region29: #{tpu_custom_call.1} parent=1 // pred_fallthru
      _
    // Predicated region
    $region30: #{tpu_custom_call.1} parent=1 // pred_check
      _
    $region31: #{tpu_custom_call.1} parent=1 // pred_check_branch
      %60 = sbr.rel (0) target = $region33
    $region32: #{tpu_custom_call.1} parent=1 // pred_region
      %61 = dma.done [#allocation6], 512
    $region33: #{tpu_custom_call.1} parent=1 // pred_fallthru
      _
    // Predicated region
    $region34: #{tpu_custom_call.1} parent=1 // pred_check
      _
    $region35: #{tpu_custom_call.1} parent=1 // pred_check_branch
      %63 = sbr.rel (0) target = $region37
    $region36: #{tpu_custom_call.1} parent=1 // pred_region
      %64 = dma.done [#allocation6], 512
    $region37: #{tpu_custom_call.1} parent=1 // pred_fallthru
      _
    %v65 = vld [vmem:[#allocation2] sm:$0xff]
    %v66 = vld [vmem:[#allocation2 + $0x8] sm:$0xff]
    %v67 = vld [vmem:[#allocation5] sm:$0xff]
    %v68 = vld [vmem:[#allocation5 + $0x8] sm:$0xff]
    %v69 = vld [vmem:[#allocation5 + $0x10] sm:$0xff]
    %v70 = vld [vmem:[#allocation5 + $0x18] sm:$0xff]
    %v71 = vld [vmem:[%s2] sm:$0x1]
    %v73 = vlaneseq
    %v74 = vshrl.u32 %v73, 7
    %v75 = vsub.s32 0, %v74
    %v76 = vrot.slane %v71, %v75
    %vm78 = vcmask 261120
    %v80 = vsel %vm78, %v65, 0
    %v83 = vsel %vm78, %v66, 0
    %85 = vmatprep.subr.mxu0 0.0
    %86 = vmatpush1.msra.mxu0 %v67
    %87 = vmatprep.subr.mxu0 0.0
    %88 = vmatpush1.msra.mxu0 %v68
    %89 = vmatprep.subr.mxu0 0.0
    %90 = vmatpush1.msra.mxu0 %v69
    %91 = vmatprep.subr.mxu0 0.0
    %92 = vmatpush1.msra.mxu0 %v70
    %93 = vmatprep.subr.mxu0 0.0
    %94 = vmatpush1.msra.mxu0 0.0
    %95 = vmatprep.subr.mxu0 0.0
    %96 = vmatpush1.msra.mxu0 0.0
    %97 = vmatprep.subr.mxu0 0.0
    %98 = vmatpush1.msra.mxu0 0.0
    %99 = vmatprep.subr.mxu0 0.0
    %100 = vmatpush1.msra.mxu0 0.0
    %101 = vmatprep.subr.mxu0 0.0
    %102 = vmatpush1.msra.mxu0 0.0
    %103 = vmatprep.subr.mxu0 0.0
    %104 = vmatpush1.msra.mxu0 0.0
    %105 = vmatprep.subr.mxu0 0.0
    %106 = vmatpush1.msra.mxu0 0.0
    %107 = vmatprep.subr.mxu0 0.0
    %108 = vmatpush1.msra.mxu0 0.0
    %109 = vmatprep.subr.mxu0 0.0
    %110 = vmatpush1.msra.mxu0 0.0
    %111 = vmatprep.subr.mxu0 0.0
    %112 = vmatpush1.msra.mxu0 0.0
    %113 = vmatprep.subr.mxu0 0.0
    %114 = vmatpush1.msra.mxu0 0.0
    %115 = vmatprep.subr.mxu0 0.0
    %116 = vmatpush1.msra.mxu0 0.0
    %117 = vmatprep.subr.mxu0 0.0
    %118 = vmatpush1.msra.mxu0 0.0
    %119 = vmatprep.subr.mxu0 0.0
    %120 = vmatpush1.msra.mxu0 0.0
    %121 = vmatprep.subr.mxu0 0.0
    %122 = vmatpush1.msra.mxu0 0.0
    %123 = vmatprep.subr.mxu0 0.0
    %124 = vmatpush1.msra.mxu0 0.0
    %125 = vmatprep.subr.mxu0 0.0
    %126 = vmatpush1.msra.mxu0 0.0
    %127 = vmatprep.subr.mxu0 0.0
    %128 = vmatpush1.msra.mxu0 0.0
    %129 = vmatprep.subr.mxu0 0.0
    %130 = vmatpush1.msra.mxu0 0.0
    %131 = vmatprep.subr.mxu0 0.0
    %132 = vmatpush1.msra.mxu0 0.0
    %133 = vmatprep.subr.mxu0 0.0
    %134 = vmatpush1.msra.mxu0 0.0
    %135 = vmatprep.subr.mxu0 0.0
    %136 = vmatpush1.msra.mxu0 0.0
    %137 = vmatprep.subr.mxu0 0.0
    %138 = vmatpush1.msra.mxu0 0.0
    %139 = vmatprep.subr.mxu0 0.0
    %140 = vmatpush1.msra.mxu0 0.0
    %141 = vmatprep.subr.mxu0 0.0
    %142 = vmatpush1.msra.mxu0 0.0
    %143 = vmatprep.subr.mxu0 0.0
    %144 = vmatpush1.msra.mxu0 0.0
    %145 = vmatprep.subr.mxu0 0.0
    %146 = vmatpush1.msra.mxu0 0.0
    %147 = vmatprep.subr.mxu0 0.0
    %148 = vmatpush1.msra.mxu0 0.0
    %149 = vmatprep.mubr.f32.mxu0 0.0
    %150 = vmatmul.mubr.f32.gmra.mrb[0].mxu0 %v80
    %v151 = vpop.f32.mrb[0].mxu0
    %v152 = vadd.f32 %v76, %v151
    %v153 = vpop.f32.mrb[0].mxu0
    %154 = vmatprep.mubr.f32.mxu0 0.0
    %155 = vmatmul.mubr.f32.gmra.mrb[0].mxu0 %v83
    %v156 = vpop.f32.mrb[0].mxu0
    %v157 = vadd.f32 %v76, %v156
    %v158 = vpop.f32.mrb[0].mxu0
    %159 = vdwg.mxu0
    %v160 = vld [vmem:[%s5] sm:$0xff]
    %v161 = vld [vmem:[%s5 + $0x8] sm:$0xff]
    %v162 = vld [vmem:[#allocation7] sm:$0xff]
    %v163 = vld [vmem:[#allocation7 + $0x8] sm:$0xff]
    %v164 = vld [vmem:[#allocation7 + $0x10] sm:$0xff]
    %v165 = vld [vmem:[#allocation7 + $0x18] sm:$0xff]
    %168 = vrot.lane.b32.xlu0 %v152, 96
    %v169 = vpop.permute.xlu0 %168
    %170 = vrot.lane.b32.xlu0 %v157, 96
    %v171 = vpop.permute.xlu0 %170
    %vm172 = vcmask 64512
    %v173 = vsel %vm172, %v152, 0
    %v175 = vsel %vm172, %v157, 0
    %v177 = vsel %vm172, %v169, 0
    %v179 = vsel %vm172, %v171, 0
    %181 = vmatprep.subr.mxu0 0.0
    %182 = vmatpush1.xpose.msra.mxu0 %v177
    %183 = vmatprep.subr.mxu0 0.0
    %184 = vmatpush1.xpose.msra.mxu0 %v179
    %185 = vmatprep.subr.mxu0 0.0
    %186 = vmatpush1.xpose.msra.mxu0 0.0
    %187 = vmatprep.subr.mxu0 0.0
    %188 = vmatpush1.xpose.msra.mxu0 0.0
    %189 = vmatprep.subr.mxu0 0.0
    %190 = vmatpush1.xpose.msra.mxu0 0.0
    %191 = vmatprep.subr.mxu0 0.0
    %192 = vmatpush1.xpose.msra.mxu0 0.0
    %193 = vmatprep.subr.mxu0 0.0
    %194 = vmatpush1.xpose.msra.mxu0 0.0
    %195 = vmatprep.subr.mxu0 0.0
    %196 = vmatpush1.xpose.msra.mxu0 0.0
    %197 = vmatprep.subr.mxu0 0.0
    %198 = vmatpush1.xpose.msra.mxu0 0.0
    %199 = vmatprep.subr.mxu0 0.0
    %200 = vmatpush1.xpose.msra.mxu0 0.0
    %201 = vmatprep.subr.mxu0 0.0
    %202 = vmatpush1.xpose.msra.mxu0 0.0
    %203 = vmatprep.subr.mxu0 0.0
    %204 = vmatpush1.xpose.msra.mxu0 0.0
    %205 = vmatprep.subr.mxu0 0.0
    %206 = vmatpush1.xpose.msra.mxu0 0.0
    %207 = vmatprep.subr.mxu0 0.0
    %208 = vmatpush1.xpose.msra.mxu0 0.0
    %209 = vmatprep.subr.mxu0 0.0
    %210 = vmatpush1.xpose.msra.mxu0 0.0
    %211 = vmatprep.subr.mxu0 0.0
    %212 = vmatpush1.xpose.msra.mxu0 0.0
    %213 = vmatprep.subr.mxu0 0.0
    %214 = vmatpush1.xpose.msra.mxu0 0.0
    %215 = vmatprep.subr.mxu0 0.0
    %216 = vmatpush1.xpose.msra.mxu0 0.0
    %217 = vmatprep.subr.mxu0 0.0
    %218 = vmatpush1.xpose.msra.mxu0 0.0
    %219 = vmatprep.subr.mxu0 0.0
    %220 = vmatpush1.xpose.msra.mxu0 0.0
    %221 = vmatprep.subr.mxu0 0.0
    %222 = vmatpush1.xpose.msra.mxu0 0.0
    %223 = vmatprep.subr.mxu0 0.0
    %224 = vmatpush1.xpose.msra.mxu0 0.0
    %225 = vmatprep.subr.mxu0 0.0
    %226 = vmatpush1.xpose.msra.mxu0 0.0
    %227 = vmatprep.subr.mxu0 0.0
    %228 = vmatpush1.xpose.msra.mxu0 0.0
    %229 = vmatprep.subr.mxu0 0.0
    %230 = vmatpush1.xpose.msra.mxu0 0.0
    %231 = vmatprep.subr.mxu0 0.0
    %232 = vmatpush1.xpose.msra.mxu0 0.0
    %233 = vmatprep.subr.mxu0 0.0
    %234 = vmatpush1.xpose.msra.mxu0 0.0
    %235 = vmatprep.subr.mxu0 0.0
    %236 = vmatpush1.xpose.msra.mxu0 0.0
    %237 = vmatprep.subr.mxu0 0.0
    %238 = vmatpush1.xpose.msra.mxu0 0.0
    %239 = vmatprep.subr.mxu0 0.0
    %240 = vmatpush1.xpose.msra.mxu0 0.0
    %241 = vmatprep.subr.mxu0 0.0
    %242 = vmatpush1.xpose.msra.mxu0 0.0
    %243 = vmatprep.subr.mxu0 0.0
    %244 = vmatpush1.xpose.msra.mxu0 0.0
    %245 = vmatprep.mubr.f32.mxu0 0.0
    %246 = vmatmul.mubr.f32.gmra.mrb[0].mxu0 %v173
    %v247 = vpop.f32.mrb[0].mxu0
    %v248 = vadd.f32 0.0, %v247
    %v249 = vpop.f32.mrb[0].mxu0
    %250 = vmatprep.mubr.f32.mxu0 0.0
    %251 = vmatmul.mubr.f32.gmra.mrb[0].mxu0 %v175
    %v252 = vpop.f32.mrb[0].mxu0
    %v253 = vadd.f32 0.0, %v252
    %v254 = vpop.f32.mrb[0].mxu0
    %255 = vdwg.mxu0
    %v256 = vmul.f32 %v248, 0.35355338
    %v257 = vmul.f32 %v253, 0.35355338
    %v258 = vadd.f32 %v256, %v160
    %v259 = vadd.f32 %v257, %v161
    %vm260 = vcmask 130048
    %v261 = vsel %vm260, %v258, -inf
    %262 = vmax.xlane.f32.xlu0 %v261
    %v263 = vpop.xlane.xlu0 %262
    %v264 = vsel %vm260, %v259, -inf
    %265 = vmax.xlane.f32.xlu0 %v264
    %v266 = vpop.xlane.xlu0 %265
    %v267 = vsub.f32 %v258, %v263
    %v268 = vsub.f32 %v259, %v266
    %v269 = vmul.f32 %v267, 1.442695
    %v270 = vpow.pop %v269
    %v271 = vmul.f32 %v268, 1.442695
    %v272 = vpow.pop %v271
    %v273 = vsel %vm260, %v270, 0.0
    %274 = vadd.xlane.f32.xlu0 %v273
    %v275 = vpop.xlane.xlu0 %274
    %v276 = vsel %vm260, %v272, 0.0
    %277 = vadd.xlane.f32.xlu0 %v276
    %v278 = vpop.xlane.xlu0 %277
    %279 = vrot.lane.b32.xlu0 %v152, 64
    %v280 = vpop.permute.xlu0 %279
    %281 = vrot.lane.b32.xlu0 %v157, 64
    %v282 = vpop.permute.xlu0 %281
    %v286 = vsel %vm260, %v270, 0
    %v289 = vsel %vm260, %v272, 0
    %291 = vmatprep.subr.mxu0 0.0
    %292 = vmatpush1.msra.mxu0 %v280
    %293 = vmatprep.subr.mxu0 0.0
    %294 = vmatpush1.msra.mxu0 %v282
    %295 = vmatprep.subr.mxu0 0.0
    %296 = vmatpush1.msra.mxu0 0.0
    %297 = vmatprep.subr.mxu0 0.0
    %298 = vmatpush1.msra.mxu0 0.0
    %299 = vmatprep.subr.mxu0 0.0
    %300 = vmatpush1.msra.mxu0 0.0
    %301 = vmatprep.subr.mxu0 0.0
    %302 = vmatpush1.msra.mxu0 0.0
    %303 = vmatprep.subr.mxu0 0.0
    %304 = vmatpush1.msra.mxu0 0.0
    %305 = vmatprep.subr.mxu0 0.0
    %306 = vmatpush1.msra.mxu0 0.0
    %307 = vmatprep.subr.mxu0 0.0
    %308 = vmatpush1.msra.mxu0 0.0
    %309 = vmatprep.subr.mxu0 0.0
    %310 = vmatpush1.msra.mxu0 0.0
    %311 = vmatprep.subr.mxu0 0.0
    %312 = vmatpush1.msra.mxu0 0.0
    %313 = vmatprep.subr.mxu0 0.0
    %314 = vmatpush1.msra.mxu0 0.0
    %315 = vmatprep.subr.mxu0 0.0
    %316 = vmatpush1.msra.mxu0 0.0
    %317 = vmatprep.subr.mxu0 0.0
    %318 = vmatpush1.msra.mxu0 0.0
    %319 = vmatprep.subr.mxu0 0.0
    %320 = vmatpush1.msra.mxu0 0.0
    %321 = vmatprep.subr.mxu0 0.0
    %322 = vmatpush1.msra.mxu0 0.0
    %323 = vmatprep.subr.mxu0 0.0
    %324 = vmatpush1.msra.mxu0 0.0
    %325 = vmatprep.subr.mxu0 0.0
    %326 = vmatpush1.msra.mxu0 0.0
    %327 = vmatprep.subr.mxu0 0.0
    %328 = vmatpush1.msra.mxu0 0.0
    %329 = vmatprep.subr.mxu0 0.0
    %330 = vmatpush1.msra.mxu0 0.0
    %331 = vmatprep.subr.mxu0 0.0
    %332 = vmatpush1.msra.mxu0 0.0
    %333 = vmatprep.subr.mxu0 0.0
    %334 = vmatpush1.msra.mxu0 0.0
    %335 = vmatprep.subr.mxu0 0.0
    %336 = vmatpush1.msra.mxu0 0.0
    %337 = vmatprep.subr.mxu0 0.0
    %338 = vmatpush1.msra.mxu0 0.0
    %339 = vmatprep.subr.mxu0 0.0
    %340 = vmatpush1.msra.mxu0 0.0
    %341 = vmatprep.subr.mxu0 0.0
    %342 = vmatpush1.msra.mxu0 0.0
    %343 = vmatprep.subr.mxu0 0.0
    %344 = vmatpush1.msra.mxu0 0.0
    %345 = vmatprep.subr.mxu0 0.0
    %346 = vmatpush1.msra.mxu0 0.0
    %347 = vmatprep.subr.mxu0 0.0
    %348 = vmatpush1.msra.mxu0 0.0
    %349 = vmatprep.subr.mxu0 0.0
    %350 = vmatpush1.msra.mxu0 0.0
    %351 = vmatprep.subr.mxu0 0.0
    %352 = vmatpush1.msra.mxu0 0.0
    %353 = vmatprep.subr.mxu0 0.0
    %354 = vmatpush1.msra.mxu0 0.0
    %355 = vmatprep.mubr.f32.mxu0 0.0
    %356 = vmatmul.mubr.f32.gmra.mrb[0].mxu0 %v286
    %v357 = vpop.f32.mrb[0].mxu0
    %v358 = vadd.f32 0.0, %v357
    %v359 = vpop.f32.mrb[0].mxu0
    %360 = vmatprep.mubr.f32.mxu0 0.0
    %361 = vmatmul.mubr.f32.gmra.mrb[0].mxu0 %v289
    %v362 = vpop.f32.mrb[0].mxu0
    %v363 = vadd.f32 0.0, %v362
    %v364 = vpop.f32.mrb[0].mxu0
    %365 = vdwg.mxu0
    %v366 = vrcp.pop %v275
    %v367 = vmul.f32 %v358, %v366
    %v368 = vrcp.pop %v278
    %v369 = vmul.f32 %v363, %v368
    %370 = vrot.lane.b32.xlu0 %v152, 120
    %v371 = vpop.permute.xlu0 %370
    %372 = vrot.lane.b32.xlu0 %v157, 120
    %v373 = vpop.permute.xlu0 %372
    %374 = vrot.lane.b32.xlu0 %v152, 88
    %v375 = vpop.permute.xlu0 %374
    %376 = vrot.lane.b32.xlu0 %v157, 88
    %v377 = vpop.permute.xlu0 %376
    %v378 = vsel %vm172, %v371, 0
    %v380 = vsel %vm172, %v373, 0
    %v382 = vsel %vm172, %v375, 0
    %v384 = vsel %vm172, %v377, 0
    %386 = vmatprep.subr.mxu0 0.0
    %387 = vmatpush1.xpose.msra.mxu0 %v382
    %388 = vmatprep.subr.mxu0 0.0
    %389 = vmatpush1.xpose.msra.mxu0 %v384
    %390 = vmatprep.subr.mxu0 0.0
    %391 = vmatpush1.xpose.msra.mxu0 0.0
    %392 = vmatprep.subr.mxu0 0.0
    %393 = vmatpush1.xpose.msra.mxu0 0.0
    %394 = vmatprep.subr.mxu0 0.0
    %395 = vmatpush1.xpose.msra.mxu0 0.0
    %396 = vmatprep.subr.mxu0 0.0
    %397 = vmatpush1.xpose.msra.mxu0 0.0
    %398 = vmatprep.subr.mxu0 0.0
    %399 = vmatpush1.xpose.msra.mxu0 0.0
    %400 = vmatprep.subr.mxu0 0.0
    %401 = vmatpush1.xpose.msra.mxu0 0.0
    %402 = vmatprep.subr.mxu0 0.0
    %403 = vmatpush1.xpose.msra.mxu0 0.0
    %404 = vmatprep.subr.mxu0 0.0
    %405 = vmatpush1.xpose.msra.mxu0 0.0
    %406 = vmatprep.subr.mxu0 0.0
    %407 = vmatpush1.xpose.msra.mxu0 0.0
    %408 = vmatprep.subr.mxu0 0.0
    %409 = vmatpush1.xpose.msra.mxu0 0.0
    %410 = vmatprep.subr.mxu0 0.0
    %411 = vmatpush1.xpose.msra.mxu0 0.0
    %412 = vmatprep.subr.mxu0 0.0
    %413 = vmatpush1.xpose.msra.mxu0 0.0
    %414 = vmatprep.subr.mxu0 0.0
    %415 = vmatpush1.xpose.msra.mxu0 0.0
    %416 = vmatprep.subr.mxu0 0.0
    %417 = vmatpush1.xpose.msra.mxu0 0.0
    %418 = vmatprep.subr.mxu0 0.0
    %419 = vmatpush1.xpose.msra.mxu0 0.0
    %420 = vmatprep.subr.mxu0 0.0
    %421 = vmatpush1.xpose.msra.mxu0 0.0
    %422 = vmatprep.subr.mxu0 0.0
    %423 = vmatpush1.xpose.msra.mxu0 0.0
    %424 = vmatprep.subr.mxu0 0.0
    %425 = vmatpush1.xpose.msra.mxu0 0.0
    %426 = vmatprep.subr.mxu0 0.0
    %427 = vmatpush1.xpose.msra.mxu0 0.0
    %428 = vmatprep.subr.mxu0 0.0
    %429 = vmatpush1.xpose.msra.mxu0 0.0
    %430 = vmatprep.subr.mxu0 0.0
    %431 = vmatpush1.xpose.msra.mxu0 0.0
    %432 = vmatprep.subr.mxu0 0.0
    %433 = vmatpush1.xpose.msra.mxu0 0.0
    %434 = vmatprep.subr.mxu0 0.0
    %435 = vmatpush1.xpose.msra.mxu0 0.0
    %436 = vmatprep.subr.mxu0 0.0
    %437 = vmatpush1.xpose.msra.mxu0 0.0
    %438 = vmatprep.subr.mxu0 0.0
    %439 = vmatpush1.xpose.msra.mxu0 0.0
    %440 = vmatprep.subr.mxu0 0.0
    %441 = vmatpush1.xpose.msra.mxu0 0.0
    %442 = vmatprep.subr.mxu0 0.0
    %443 = vmatpush1.xpose.msra.mxu0 0.0
    %444 = vmatprep.subr.mxu0 0.0
    %445 = vmatpush1.xpose.msra.mxu0 0.0
    %446 = vmatprep.subr.mxu0 0.0
    %447 = vmatpush1.xpose.msra.mxu0 0.0
    %448 = vmatprep.subr.mxu0 0.0
    %449 = vmatpush1.xpose.msra.mxu0 0.0
    %450 = vmatprep.mubr.f32.mxu0 0.0
    %451 = vmatmul.mubr.f32.gmra.mrb[0].mxu0 %v378
    %v452 = vpop.f32.mrb[0].mxu0
    %v453 = vadd.f32 0.0, %v452
    %v454 = vpop.f32.mrb[0].mxu0
    %455 = vmatprep.mubr.f32.mxu0 0.0
    %456 = vmatmul.mubr.f32.gmra.mrb[0].mxu0 %v380
    %v457 = vpop.f32.mrb[0].mxu0
    %v458 = vadd.f32 0.0, %v457
    %v459 = vpop.f32.mrb[0].mxu0
    %460 = vdwg.mxu0
    %v461 = vmul.f32 %v453, 0.35355338
    %v462 = vmul.f32 %v458, 0.35355338
    %v463 = vadd.f32 %v461, %v160
    %v464 = vadd.f32 %v462, %v161
    %v465 = vsel %vm260, %v463, -inf
    %466 = vmax.xlane.f32.xlu0 %v465
    %v467 = vpop.xlane.xlu0 %466
    %v468 = vsel %vm260, %v464, -inf
    %469 = vmax.xlane.f32.xlu0 %v468
    %v470 = vpop.xlane.xlu0 %469
    %v471 = vsub.f32 %v463, %v467
    %v472 = vsub.f32 %v464, %v470
    %v473 = vmul.f32 %v471, 1.442695
    %v474 = vpow.pop %v473
    %v475 = vmul.f32 %v472, 1.442695
    %v476 = vpow.pop %v475
    %v477 = vsel %vm260, %v474, 0.0
    %478 = vadd.xlane.f32.xlu0 %v477
    %v479 = vpop.xlane.xlu0 %478
    %v480 = vsel %vm260, %v476, 0.0
    %481 = vadd.xlane.f32.xlu0 %v480
    %v482 = vpop.xlane.xlu0 %481
    %483 = vrot.lane.b32.xlu0 %v152, 56
    %v484 = vpop.permute.xlu0 %483
    %485 = vrot.lane.b32.xlu0 %v157, 56
    %v486 = vpop.permute.xlu0 %485
    %v490 = vsel %vm260, %v474, 0
    %v493 = vsel %vm260, %v476, 0
    %495 = vmatprep.subr.mxu0 0.0
    %496 = vmatpush1.msra.mxu0 %v484
    %497 = vmatprep.subr.mxu0 0.0
    %498 = vmatpush1.msra.mxu0 %v486
    %499 = vmatprep.subr.mxu0 0.0
    %500 = vmatpush1.msra.mxu0 0.0
    %501 = vmatprep.subr.mxu0 0.0
    %502 = vmatpush1.msra.mxu0 0.0
    %503 = vmatprep.subr.mxu0 0.0
    %504 = vmatpush1.msra.mxu0 0.0
    %505 = vmatprep.subr.mxu0 0.0
    %506 = vmatpush1.msra.mxu0 0.0
    %507 = vmatprep.subr.mxu0 0.0
    %508 = vmatpush1.msra.mxu0 0.0
    %509 = vmatprep.subr.mxu0 0.0
    %510 = vmatpush1.msra.mxu0 0.0
    %511 = vmatprep.subr.mxu0 0.0
    %512 = vmatpush1.msra.mxu0 0.0
    %513 = vmatprep.subr.mxu0 0.0
    %514 = vmatpush1.msra.mxu0 0.0
    %515 = vmatprep.subr.mxu0 0.0
    %516 = vmatpush1.msra.mxu0 0.0
    %517 = vmatprep.subr.mxu0 0.0
    %518 = vmatpush1.msra.mxu0 0.0
    %519 = vmatprep.subr.mxu0 0.0
    %520 = vmatpush1.msra.mxu0 0.0
    %521 = vmatprep.subr.mxu0 0.0
    %522 = vmatpush1.msra.mxu0 0.0
    %523 = vmatprep.subr.mxu0 0.0
    %524 = vmatpush1.msra.mxu0 0.0
    %525 = vmatprep.subr.mxu0 0.0
    %526 = vmatpush1.msra.mxu0 0.0
    %527 = vmatprep.subr.mxu0 0.0
    %528 = vmatpush1.msra.mxu0 0.0
    %529 = vmatprep.subr.mxu0 0.0
    %530 = vmatpush1.msra.mxu0 0.0
    %531 = vmatprep.subr.mxu0 0.0
    %532 = vmatpush1.msra.mxu0 0.0
    %533 = vmatprep.subr.mxu0 0.0
    %534 = vmatpush1.msra.mxu0 0.0
    %535 = vmatprep.subr.mxu0 0.0
    %536 = vmatpush1.msra.mxu0 0.0
    %537 = vmatprep.subr.mxu0 0.0
    %538 = vmatpush1.msra.mxu0 0.0
    %539 = vmatprep.subr.mxu0 0.0
    %540 = vmatpush1.msra.mxu0 0.0
    %541 = vmatprep.subr.mxu0 0.0
    %542 = vmatpush1.msra.mxu0 0.0
    %543 = vmatprep.subr.mxu0 0.0
    %544 = vmatpush1.msra.mxu0 0.0
    %545 = vmatprep.subr.mxu0 0.0
    %546 = vmatpush1.msra.mxu0 0.0
    %547 = vmatprep.subr.mxu0 0.0
    %548 = vmatpush1.msra.mxu0 0.0
    %549 = vmatprep.subr.mxu0 0.0
    %550 = vmatpush1.msra.mxu0 0.0
    %551 = vmatprep.subr.mxu0 0.0
    %552 = vmatpush1.msra.mxu0 0.0
    %553 = vmatprep.subr.mxu0 0.0
    %554 = vmatpush1.msra.mxu0 0.0
    %555 = vmatprep.subr.mxu0 0.0
    %556 = vmatpush1.msra.mxu0 0.0
    %557 = vmatprep.subr.mxu0 0.0
    %558 = vmatpush1.msra.mxu0 0.0
    %559 = vmatprep.mubr.f32.mxu0 0.0
    %560 = vmatmul.mubr.f32.gmra.mrb[0].mxu0 %v490
    %v561 = vpop.f32.mrb[0].mxu0
    %v562 = vadd.f32 0.0, %v561
    %v563 = vpop.f32.mrb[0].mxu0
    %564 = vmatprep.mubr.f32.mxu0 0.0
    %565 = vmatmul.mubr.f32.gmra.mrb[0].mxu0 %v493
    %v566 = vpop.f32.mrb[0].mxu0
    %v567 = vadd.f32 0.0, %v566
    %v568 = vpop.f32.mrb[0].mxu0
    %569 = vdwg.mxu0
    %v570 = vrcp.pop %v479
    %v571 = vmul.f32 %v562, %v570
    %v572 = vrcp.pop %v482
    %v573 = vmul.f32 %v567, %v572
    %v575 = vsel %vm172, %v571, 0
    %v578 = vsel %vm172, %v573, 0
    %580 = vmatprep.subr.mxu0 0.0
    %581 = vmatpush1.msra.mxu0 %v163
    %582 = vmatprep.subr.mxu0 0.0
    %583 = vmatpush1.msra.mxu0 0.0
    %584 = vmatprep.subr.mxu0 0.0
    %585 = vmatpush1.msra.mxu0 0.0
    %586 = vmatprep.subr.mxu0 0.0
    %587 = vmatpush1.msra.mxu0 0.0
    %588 = vmatprep.subr.mxu0 0.0
    %589 = vmatpush1.msra.mxu0 0.0
    %590 = vmatprep.subr.mxu0 0.0
    %591 = vmatpush1.msra.mxu0 0.0
    %592 = vmatprep.subr.mxu0 0.0
    %593 = vmatpush1.msra.mxu0 0.0
    %594 = vmatprep.subr.mxu0 0.0
    %595 = vmatpush1.msra.mxu0 0.0
    %596 = vmatprep.subr.mxu0 0.0
    %597 = vmatpush1.msra.mxu0 0.0
    %598 = vmatprep.subr.mxu0 0.0
    %599 = vmatpush1.msra.mxu0 0.0
    %600 = vmatprep.subr.mxu0 0.0
    %601 = vmatpush1.msra.mxu0 0.0
    %602 = vmatprep.subr.mxu0 0.0
    %603 = vmatpush1.msra.mxu0 0.0
    %604 = vmatprep.subr.mxu0 0.0
    %605 = vmatpush1.msra.mxu0 0.0
    %606 = vmatprep.subr.mxu0 0.0
    %607 = vmatpush1.msra.mxu0 0.0
    %608 = vmatprep.subr.mxu0 0.0
    %609 = vmatpush1.msra.mxu0 0.0
    %610 = vmatprep.subr.mxu0 0.0
    %611 = vmatpush1.msra.mxu0 0.0
    %612 = vmatprep.subr.mxu0 0.0
    %613 = vmatpush1.msra.mxu0 0.0
    %614 = vmatprep.subr.mxu0 0.0
    %615 = vmatpush1.msra.mxu0 0.0
    %616 = vmatprep.subr.mxu0 0.0
    %617 = vmatpush1.msra.mxu0 0.0
    %618 = vmatprep.subr.mxu0 0.0
    %619 = vmatpush1.msra.mxu0 0.0
    %620 = vmatprep.subr.mxu0 0.0
    %621 = vmatpush1.msra.mxu0 0.0
    %622 = vmatprep.subr.mxu0 0.0
    %623 = vmatpush1.msra.mxu0 0.0
    %624 = vmatprep.subr.mxu0 0.0
    %625 = vmatpush1.msra.mxu0 0.0
    %626 = vmatprep.subr.mxu0 0.0
    %627 = vmatpush1.msra.mxu0 0.0
    %628 = vmatprep.subr.mxu0 0.0
    %629 = vmatpush1.msra.mxu0 0.0
    %630 = vmatprep.subr.mxu0 0.0
    %631 = vmatpush1.msra.mxu0 0.0
    %632 = vmatprep.subr.mxu0 0.0
    %633 = vmatpush1.msra.mxu0 0.0
    %634 = vmatprep.subr.mxu0 0.0
    %635 = vmatpush1.msra.mxu0 0.0
    %636 = vmatprep.subr.mxu0 0.0
    %637 = vmatpush1.msra.mxu0 0.0
    %638 = vmatprep.subr.mxu0 0.0
    %639 = vmatpush1.msra.mxu0 0.0
    %640 = vmatprep.subr.mxu0 0.0
    %641 = vmatpush1.msra.mxu0 0.0
    %642 = vmatprep.subr.mxu0 0.0
    %643 = vmatpush1.msra.mxu0 0.0
    %644 = vmatprep.mubr.f32.mxu0 0.0
    %645 = vmatmul.mubr.f32.gmra.mrb[0].mxu0 %v575
    %v646 = vpop.f32.mrb[0].mxu0
    %v647 = vadd.f32 0.0, %v646
    %v648 = vpop.f32.mrb[0].mxu0
    %649 = vmatprep.mubr.f32.mxu0 0.0
    %650 = vmatmul.mubr.f32.gmra.mrb[0].mxu0 %v578
    %v651 = vpop.f32.mrb[0].mxu0
    %v652 = vadd.f32 0.0, %v651
    %v653 = vpop.f32.mrb[0].mxu0
    %654 = vdwg.mxu0
    %v656 = vsel %vm172, %v367, 0
    %v659 = vsel %vm172, %v369, 0
    %661 = vmatprep.subr.mxu0 0.0
    %662 = vmatpush1.msra.mxu0 %v162
    %663 = vmatprep.subr.mxu0 0.0
    %664 = vmatpush1.msra.mxu0 0.0
    %665 = vmatprep.subr.mxu0 0.0
    %666 = vmatpush1.msra.mxu0 0.0
    %667 = vmatprep.subr.mxu0 0.0
    %668 = vmatpush1.msra.mxu0 0.0
    %669 = vmatprep.subr.mxu0 0.0
    %670 = vmatpush1.msra.mxu0 0.0
    %671 = vmatprep.subr.mxu0 0.0
    %672 = vmatpush1.msra.mxu0 0.0
    %673 = vmatprep.subr.mxu0 0.0
    %674 = vmatpush1.msra.mxu0 0.0
    %675 = vmatprep.subr.mxu0 0.0
    %676 = vmatpush1.msra.mxu0 0.0
    %677 = vmatprep.subr.mxu0 0.0
    %678 = vmatpush1.msra.mxu0 0.0
    %679 = vmatprep.subr.mxu0 0.0
    %680 = vmatpush1.msra.mxu0 0.0
    %681 = vmatprep.subr.mxu0 0.0
    %682 = vmatpush1.msra.mxu0 0.0
    %683 = vmatprep.subr.mxu0 0.0
    %684 = vmatpush1.msra.mxu0 0.0
    %685 = vmatprep.subr.mxu0 0.0
    %686 = vmatpush1.msra.mxu0 0.0
    %687 = vmatprep.subr.mxu0 0.0
    %688 = vmatpush1.msra.mxu0 0.0
    %689 = vmatprep.subr.mxu0 0.0
    %690 = vmatpush1.msra.mxu0 0.0
    %691 = vmatprep.subr.mxu0 0.0
    %692 = vmatpush1.msra.mxu0 0.0
    %693 = vmatprep.subr.mxu0 0.0
    %694 = vmatpush1.msra.mxu0 0.0
    %695 = vmatprep.subr.mxu0 0.0
    %696 = vmatpush1.msra.mxu0 0.0
    %697 = vmatprep.subr.mxu0 0.0
    %698 = vmatpush1.msra.mxu0 0.0
    %699 = vmatprep.subr.mxu0 0.0
    %700 = vmatpush1.msra.mxu0 0.0
    %701 = vmatprep.subr.mxu0 0.0
    %702 = vmatpush1.msra.mxu0 0.0
    %703 = vmatprep.subr.mxu0 0.0
    %704 = vmatpush1.msra.mxu0 0.0
    %705 = vmatprep.subr.mxu0 0.0
    %706 = vmatpush1.msra.mxu0 0.0
    %707 = vmatprep.subr.mxu0 0.0
    %708 = vmatpush1.msra.mxu0 0.0
    %709 = vmatprep.subr.mxu0 0.0
    %710 = vmatpush1.msra.mxu0 0.0
    %711 = vmatprep.subr.mxu0 0.0
    %712 = vmatpush1.msra.mxu0 0.0
    %713 = vmatprep.subr.mxu0 0.0
    %714 = vmatpush1.msra.mxu0 0.0
    %715 = vmatprep.subr.mxu0 0.0
    %716 = vmatpush1.msra.mxu0 0.0
    %717 = vmatprep.subr.mxu0 0.0
    %718 = vmatpush1.msra.mxu0 0.0
    %719 = vmatprep.subr.mxu0 0.0
    %720 = vmatpush1.msra.mxu0 0.0
    %721 = vmatprep.subr.mxu0 0.0
    %722 = vmatpush1.msra.mxu0 0.0
    %723 = vmatprep.subr.mxu0 0.0
    %724 = vmatpush1.msra.mxu0 0.0
    %725 = vmatprep.mubr.f32.mxu0 0.0
    %726 = vmatmul.mubr.f32.gmra.mrb[0].mxu0 %v656
    %v727 = vpop.f32.mrb[0].mxu0
    %v728 = vadd.f32 %v647, %v727
    %v729 = vpop.f32.mrb[0].mxu0
    %730 = vmatprep.mubr.f32.mxu0 0.0
    %731 = vmatmul.mubr.f32.gmra.mrb[0].mxu0 %v659
    %v732 = vpop.f32.mrb[0].mxu0
    %v733 = vadd.f32 %v652, %v732
    %v734 = vpop.f32.mrb[0].mxu0
    %735 = vdwg.mxu0
    %736 = vrot.lane.b32.xlu0 %v152, 112
    %v737 = vpop.permute.xlu0 %736
    %738 = vrot.lane.b32.xlu0 %v157, 112
    %v739 = vpop.permute.xlu0 %738
    %740 = vrot.lane.b32.xlu0 %v152, 80
    %v741 = vpop.permute.xlu0 %740
    %742 = vrot.lane.b32.xlu0 %v157, 80
    %v743 = vpop.permute.xlu0 %742
    %v744 = vsel %vm172, %v737, 0
    %v746 = vsel %vm172, %v739, 0
    %v748 = vsel %vm172, %v741, 0
    %v750 = vsel %vm172, %v743, 0
    %752 = vmatprep.subr.mxu0 0.0
    %753 = vmatpush1.xpose.msra.mxu0 %v748
    %754 = vmatprep.subr.mxu0 0.0
    %755 = vmatpush1.xpose.msra.mxu0 %v750
    %756 = vmatprep.subr.mxu0 0.0
    %757 = vmatpush1.xpose.msra.mxu0 0.0
    %758 = vmatprep.subr.mxu0 0.0
    %759 = vmatpush1.xpose.msra.mxu0 0.0
    %760 = vmatprep.subr.mxu0 0.0
    %761 = vmatpush1.xpose.msra.mxu0 0.0
    %762 = vmatprep.subr.mxu0 0.0
    %763 = vmatpush1.xpose.msra.mxu0 0.0
    %764 = vmatprep.subr.mxu0 0.0
    %765 = vmatpush1.xpose.msra.mxu0 0.0
    %766 = vmatprep.subr.mxu0 0.0
    %767 = vmatpush1.xpose.msra.mxu0 0.0
    %768 = vmatprep.subr.mxu0 0.0
    %769 = vmatpush1.xpose.msra.mxu0 0.0
    %770 = vmatprep.subr.mxu0 0.0
    %771 = vmatpush1.xpose.msra.mxu0 0.0
    %772 = vmatprep.subr.mxu0 0.0
    %773 = vmatpush1.xpose.msra.mxu0 0.0
    %774 = vmatprep.subr.mxu0 0.0
    %775 = vmatpush1.xpose.msra.mxu0 0.0
    %776 = vmatprep.subr.mxu0 0.0
    %777 = vmatpush1.xpose.msra.mxu0 0.0
    %778 = vmatprep.subr.mxu0 0.0
    %779 = vmatpush1.xpose.msra.mxu0 0.0
    %780 = vmatprep.subr.mxu0 0.0
    %781 = vmatpush1.xpose.msra.mxu0 0.0
    %782 = vmatprep.subr.mxu0 0.0
    %783 = vmatpush1.xpose.msra.mxu0 0.0
    %784 = vmatprep.subr.mxu0 0.0
    %785 = vmatpush1.xpose.msra.mxu0 0.0
    %786 = vmatprep.subr.mxu0 0.0
    %787 = vmatpush1.xpose.msra.mxu0 0.0
    %788 = vmatprep.subr.mxu0 0.0
    %789 = vmatpush1.xpose.msra.mxu0 0.0
    %790 = vmatprep.subr.mxu0 0.0
    %791 = vmatpush1.xpose.msra.mxu0 0.0
    %792 = vmatprep.subr.mxu0 0.0
    %793 = vmatpush1.xpose.msra.mxu0 0.0
    %794 = vmatprep.subr.mxu0 0.0
    %795 = vmatpush1.xpose.msra.mxu0 0.0
    %796 = vmatprep.subr.mxu0 0.0
    %797 = vmatpush1.xpose.msra.mxu0 0.0
    %798 = vmatprep.subr.mxu0 0.0
    %799 = vmatpush1.xpose.msra.mxu0 0.0
    %800 = vmatprep.subr.mxu0 0.0
    %801 = vmatpush1.xpose.msra.mxu0 0.0
    %802 = vmatprep.subr.mxu0 0.0
    %803 = vmatpush1.xpose.msra.mxu0 0.0
    %804 = vmatprep.subr.mxu0 0.0
    %805 = vmatpush1.xpose.msra.mxu0 0.0
    %806 = vmatprep.subr.mxu0 0.0
    %807 = vmatpush1.xpose.msra.mxu0 0.0
    %808 = vmatprep.subr.mxu0 0.0
    %809 = vmatpush1.xpose.msra.mxu0 0.0
    %810 = vmatprep.subr.mxu0 0.0
    %811 = vmatpush1.xpose.msra.mxu0 0.0
    %812 = vmatprep.subr.mxu0 0.0
    %813 = vmatpush1.xpose.msra.mxu0 0.0
    %814 = vmatprep.subr.mxu0 0.0
    %815 = vmatpush1.xpose.msra.mxu0 0.0
    %816 = vmatprep.mubr.f32.mxu0 0.0
    %817 = vmatmul.mubr.f32.gmra.mrb[0].mxu0 %v744
    %v818 = vpop.f32.mrb[0].mxu0
    %v819 = vadd.f32 0.0, %v818
    %v820 = vpop.f32.mrb[0].mxu0
    %821 = vmatprep.mubr.f32.mxu0 0.0
    %822 = vmatmul.mubr.f32.gmra.mrb[0].mxu0 %v746
    %v823 = vpop.f32.mrb[0].mxu0
    %v824 = vadd.f32 0.0, %v823
    %v825 = vpop.f32.mrb[0].mxu0
    %826 = vdwg.mxu0
    %v827 = vmul.f32 %v819, 0.35355338
    %v828 = vmul.f32 %v824, 0.35355338
    %v829 = vadd.f32 %v827, %v160
    %v830 = vadd.f32 %v828, %v161
    %v831 = vsel %vm260, %v829, -inf
    %832 = vmax.xlane.f32.xlu0 %v831
    %v833 = vpop.xlane.xlu0 %832
    %v834 = vsel %vm260, %v830, -inf
    %835 = vmax.xlane.f32.xlu0 %v834
    %v836 = vpop.xlane.xlu0 %835
    %v837 = vsub.f32 %v829, %v833
    %v838 = vsub.f32 %v830, %v836
    %v839 = vmul.f32 %v837, 1.442695
    %v840 = vpow.pop %v839
    %v841 = vmul.f32 %v838, 1.442695
    %v842 = vpow.pop %v841
    %v843 = vsel %vm260, %v840, 0.0
    %844 = vadd.xlane.f32.xlu0 %v843
    %v845 = vpop.xlane.xlu0 %844
    %v846 = vsel %vm260, %v842, 0.0
    %847 = vadd.xlane.f32.xlu0 %v846
    %v848 = vpop.xlane.xlu0 %847
    %849 = vrot.lane.b32.xlu0 %v152, 48
    %v850 = vpop.permute.xlu0 %849
    %851 = vrot.lane.b32.xlu0 %v157, 48
    %v852 = vpop.permute.xlu0 %851
    %v856 = vsel %vm260, %v840, 0
    %v859 = vsel %vm260, %v842, 0
    %861 = vmatprep.subr.mxu0 0.0
    %862 = vmatpush1.msra.mxu0 %v850
    %863 = vmatprep.subr.mxu0 0.0
    %864 = vmatpush1.msra.mxu0 %v852
    %865 = vmatprep.subr.mxu0 0.0
    %866 = vmatpush1.msra.mxu0 0.0
    %867 = vmatprep.subr.mxu0 0.0
    %868 = vmatpush1.msra.mxu0 0.0
    %869 = vmatprep.subr.mxu0 0.0
    %870 = vmatpush1.msra.mxu0 0.0
    %871 = vmatprep.subr.mxu0 0.0
    %872 = vmatpush1.msra.mxu0 0.0
    %873 = vmatprep.subr.mxu0 0.0
    %874 = vmatpush1.msra.mxu0 0.0
    %875 = vmatprep.subr.mxu0 0.0
    %876 = vmatpush1.msra.mxu0 0.0
    %877 = vmatprep.subr.mxu0 0.0
    %878 = vmatpush1.msra.mxu0 0.0
    %879 = vmatprep.subr.mxu0 0.0
    %880 = vmatpush1.msra.mxu0 0.0
    %881 = vmatprep.subr.mxu0 0.0
    %882 = vmatpush1.msra.mxu0 0.0
    %883 = vmatprep.subr.mxu0 0.0
    %884 = vmatpush1.msra.mxu0 0.0
    %885 = vmatprep.subr.mxu0 0.0
    %886 = vmatpush1.msra.mxu0 0.0
    %887 = vmatprep.subr.mxu0 0.0
    %888 = vmatpush1.msra.mxu0 0.0
    %889 = vmatprep.subr.mxu0 0.0
    %890 = vmatpush1.msra.mxu0 0.0
    %891 = vmatprep.subr.mxu0 0.0
    %892 = vmatpush1.msra.mxu0 0.0
    %893 = vmatprep.subr.mxu0 0.0
    %894 = vmatpush1.msra.mxu0 0.0
    %895 = vmatprep.subr.mxu0 0.0
    %896 = vmatpush1.msra.mxu0 0.0
    %897 = vmatprep.subr.mxu0 0.0
    %898 = vmatpush1.msra.mxu0 0.0
    %899 = vmatprep.subr.mxu0 0.0
    %900 = vmatpush1.msra.mxu0 0.0
    %901 = vmatprep.subr.mxu0 0.0
    %902 = vmatpush1.msra.mxu0 0.0
    %903 = vmatprep.subr.mxu0 0.0
    %904 = vmatpush1.msra.mxu0 0.0
    %905 = vmatprep.subr.mxu0 0.0
    %906 = vmatpush1.msra.mxu0 0.0
    %907 = vmatprep.subr.mxu0 0.0
    %908 = vmatpush1.msra.mxu0 0.0
    %909 = vmatprep.subr.mxu0 0.0
    %910 = vmatpush1.msra.mxu0 0.0
    %911 = vmatprep.subr.mxu0 0.0
    %912 = vmatpush1.msra.mxu0 0.0
    %913 = vmatprep.subr.mxu0 0.0
    %914 = vmatpush1.msra.mxu0 0.0
    %915 = vmatprep.subr.mxu0 0.0
    %916 = vmatpush1.msra.mxu0 0.0
    %917 = vmatprep.subr.mxu0 0.0
    %918 = vmatpush1.msra.mxu0 0.0
    %919 = vmatprep.subr.mxu0 0.0
    %920 = vmatpush1.msra.mxu0 0.0
    %921 = vmatprep.subr.mxu0 0.0
    %922 = vmatpush1.msra.mxu0 0.0
    %923 = vmatprep.subr.mxu0 0.0
    %924 = vmatpush1.msra.mxu0 0.0
    %925 = vmatprep.mubr.f32.mxu0 0.0
    %926 = vmatmul.mubr.f32.gmra.mrb[0].mxu0 %v856
    %v927 = vpop.f32.mrb[0].mxu0
    %v928 = vadd.f32 0.0, %v927
    %v929 = vpop.f32.mrb[0].mxu0
    %930 = vmatprep.mubr.f32.mxu0 0.0
    %931 = vmatmul.mubr.f32.gmra.mrb[0].mxu0 %v859
    %v932 = vpop.f32.mrb[0].mxu0
    %v933 = vadd.f32 0.0, %v932
    %v934 = vpop.f32.mrb[0].mxu0
    %935 = vdwg.mxu0
    %v936 = vrcp.pop %v845
    %v937 = vmul.f32 %v928, %v936
    %v938 = vrcp.pop %v848
    %v939 = vmul.f32 %v933, %v938
    %v941 = vsel %vm172, %v937, 0
    %v944 = vsel %vm172, %v939, 0
    %946 = vmatprep.subr.mxu0 0.0
    %947 = vmatpush1.msra.mxu0 %v164
    %948 = vmatprep.subr.mxu0 0.0
    %949 = vmatpush1.msra.mxu0 0.0
    %950 = vmatprep.subr.mxu0 0.0
    %951 = vmatpush1.msra.mxu0 0.0
    %952 = vmatprep.subr.mxu0 0.0
    %953 = vmatpush1.msra.mxu0 0.0
    %954 = vmatprep.subr.mxu0 0.0
    %955 = vmatpush1.msra.mxu0 0.0
    %956 = vmatprep.subr.mxu0 0.0
    %957 = vmatpush1.msra.mxu0 0.0
    %958 = vmatprep.subr.mxu0 0.0
    %959 = vmatpush1.msra.mxu0 0.0
    %960 = vmatprep.subr.mxu0 0.0
    %961 = vmatpush1.msra.mxu0 0.0
    %962 = vmatprep.subr.mxu0 0.0
    %963 = vmatpush1.msra.mxu0 0.0
    %964 = vmatprep.subr.mxu0 0.0
    %965 = vmatpush1.msra.mxu0 0.0
    %966 = vmatprep.subr.mxu0 0.0
    %967 = vmatpush1.msra.mxu0 0.0
    %968 = vmatprep.subr.mxu0 0.0
    %969 = vmatpush1.msra.mxu0 0.0
    %970 = vmatprep.subr.mxu0 0.0
    %971 = vmatpush1.msra.mxu0 0.0
    %972 = vmatprep.subr.mxu0 0.0
    %973 = vmatpush1.msra.mxu0 0.0
    %974 = vmatprep.subr.mxu0 0.0
    %975 = vmatpush1.msra.mxu0 0.0
    %976 = vmatprep.subr.mxu0 0.0
    %977 = vmatpush1.msra.mxu0 0.0
    %978 = vmatprep.subr.mxu0 0.0
    %979 = vmatpush1.msra.mxu0 0.0
    %980 = vmatprep.subr.mxu0 0.0
    %981 = vmatpush1.msra.mxu0 0.0
    %982 = vmatprep.subr.mxu0 0.0
    %983 = vmatpush1.msra.mxu0 0.0
    %984 = vmatprep.subr.mxu0 0.0
    %985 = vmatpush1.msra.mxu0 0.0
    %986 = vmatprep.subr.mxu0 0.0
    %987 = vmatpush1.msra.mxu0 0.0
    %988 = vmatprep.subr.mxu0 0.0
    %989 = vmatpush1.msra.mxu0 0.0
    %990 = vmatprep.subr.mxu0 0.0
    %991 = vmatpush1.msra.mxu0 0.0
    %992 = vmatprep.subr.mxu0 0.0
    %993 = vmatpush1.msra.mxu0 0.0
    %994 = vmatprep.subr.mxu0 0.0
    %995 = vmatpush1.msra.mxu0 0.0
    %996 = vmatprep.subr.mxu0 0.0
    %997 = vmatpush1.msra.mxu0 0.0
    %998 = vmatprep.subr.mxu0 0.0
    %999 = vmatpush1.msra.mxu0 0.0
    %1000 = vmatprep.subr.mxu0 0.0
    %1001 = vmatpush1.msra.mxu0 0.0
    %1002 = vmatprep.subr.mxu0 0.0
    %1003 = vmatpush1.msra.mxu0 0.0
    %1004 = vmatprep.subr.mxu0 0.0
    %1005 = vmatpush1.msra.mxu0 0.0
    %1006 = vmatprep.subr.mxu0 0.0
    %1007 = vmatpush1.msra.mxu0 0.0
    %1008 = vmatprep.subr.mxu0 0.0
    %1009 = vmatpush1.msra.mxu0 0.0
    %1010 = vmatprep.mubr.f32.mxu0 0.0
    %1011 = vmatmul.mubr.f32.gmra.mrb[0].mxu0 %v941
    %v1012 = vpop.f32.mrb[0].mxu0
    %v1013 = vadd.f32 0.0, %v1012
    %v1014 = vpop.f32.mrb[0].mxu0
    %1015 = vmatprep.mubr.f32.mxu0 0.0
    %1016 = vmatmul.mubr.f32.gmra.mrb[0].mxu0 %v944
    %v1017 = vpop.f32.mrb[0].mxu0
    %v1018 = vadd.f32 0.0, %v1017
    %v1019 = vpop.f32.mrb[0].mxu0
    %1020 = vdwg.mxu0
    %v1021 = vadd.f32 %v728, %v1013
    %v1022 = vadd.f32 %v733, %v1018
    %1023 = vrot.lane.b32.xlu0 %v152, 104
    %v1024 = vpop.permute.xlu0 %1023
    %1025 = vrot.lane.b32.xlu0 %v157, 104
    %v1026 = vpop.permute.xlu0 %1025
    %1027 = vrot.lane.b32.xlu0 %v152, 72
    %v1028 = vpop.permute.xlu0 %1027
    %1029 = vrot.lane.b32.xlu0 %v157, 72
    %v1030 = vpop.permute.xlu0 %1029
    %v1031 = vsel %vm172, %v1024, 0
    %v1033 = vsel %vm172, %v1026, 0
    %v1035 = vsel %vm172, %v1028, 0
    %v1037 = vsel %vm172, %v1030, 0
    %1039 = vmatprep.subr.mxu0 0.0
    %1040 = vmatpush1.xpose.msra.mxu0 %v1035
    %1041 = vmatprep.subr.mxu0 0.0
    %1042 = vmatpush1.xpose.msra.mxu0 %v1037
    %1043 = vmatprep.subr.mxu0 0.0
    %1044 = vmatpush1.xpose.msra.mxu0 0.0
    %1045 = vmatprep.subr.mxu0 0.0
    %1046 = vmatpush1.xpose.msra.mxu0 0.0
    %1047 = vmatprep.subr.mxu0 0.0
    %1048 = vmatpush1.xpose.msra.mxu0 0.0
    %1049 = vmatprep.subr.mxu0 0.0
    %1050 = vmatpush1.xpose.msra.mxu0 0.0
    %1051 = vmatprep.subr.mxu0 0.0
    %1052 = vmatpush1.xpose.msra.mxu0 0.0
    %1053 = vmatprep.subr.mxu0 0.0
    %1054 = vmatpush1.xpose.msra.mxu0 0.0
    %1055 = vmatprep.subr.mxu0 0.0
    %1056 = vmatpush1.xpose.msra.mxu0 0.0
    %1057 = vmatprep.subr.mxu0 0.0
    %1058 = vmatpush1.xpose.msra.mxu0 0.0
    %1059 = vmatprep.subr.mxu0 0.0
    %1060 = vmatpush1.xpose.msra.mxu0 0.0
    %1061 = vmatprep.subr.mxu0 0.0
    %1062 = vmatpush1.xpose.msra.mxu0 0.0
    %1063 = vmatprep.subr.mxu0 0.0
    %1064 = vmatpush1.xpose.msra.mxu0 0.0
    %1065 = vmatprep.subr.mxu0 0.0
    %1066 = vmatpush1.xpose.msra.mxu0 0.0
    %1067 = vmatprep.subr.mxu0 0.0
    %1068 = vmatpush1.xpose.msra.mxu0 0.0
    %1069 = vmatprep.subr.mxu0 0.0
    %1070 = vmatpush1.xpose.msra.mxu0 0.0
    %1071 = vmatprep.subr.mxu0 0.0
    %1072 = vmatpush1.xpose.msra.mxu0 0.0
    %1073 = vmatprep.subr.mxu0 0.0
    %1074 = vmatpush1.xpose.msra.mxu0 0.0
    %1075 = vmatprep.subr.mxu0 0.0
    %1076 = vmatpush1.xpose.msra.mxu0 0.0
    %1077 = vmatprep.subr.mxu0 0.0
    %1078 = vmatpush1.xpose.msra.mxu0 0.0
    %1079 = vmatprep.subr.mxu0 0.0
    %1080 = vmatpush1.xpose.msra.mxu0 0.0
    %1081 = vmatprep.subr.mxu0 0.0
    %1082 = vmatpush1.xpose.msra.mxu0 0.0
    %1083 = vmatprep.subr.mxu0 0.0
    %1084 = vmatpush1.xpose.msra.mxu0 0.0
    %1085 = vmatprep.subr.mxu0 0.0
    %1086 = vmatpush1.xpose.msra.mxu0 0.0
    %1087 = vmatprep.subr.mxu0 0.0
    %1088 = vmatpush1.xpose.msra.mxu0 0.0
    %1089 = vmatprep.subr.mxu0 0.0
    %1090 = vmatpush1.xpose.msra.mxu0 0.0
    %1091 = vmatprep.subr.mxu0 0.0
    %1092 = vmatpush1.xpose.msra.mxu0 0.0
    %1093 = vmatprep.subr.mxu0 0.0
    %1094 = vmatpush1.xpose.msra.mxu0 0.0
    %1095 = vmatprep.subr.mxu0 0.0
    %1096 = vmatpush1.xpose.msra.mxu0 0.0
    %1097 = vmatprep.subr.mxu0 0.0
    %1098 = vmatpush1.xpose.msra.mxu0 0.0
    %1099 = vmatprep.subr.mxu0 0.0
    %1100 = vmatpush1.xpose.msra.mxu0 0.0
    %1101 = vmatprep.subr.mxu0 0.0
    %1102 = vmatpush1.xpose.msra.mxu0 0.0
    %1103 = vmatprep.mubr.f32.mxu0 0.0
    %1104 = vmatmul.mubr.f32.gmra.mrb[0].mxu0 %v1031
    %v1105 = vpop.f32.mrb[0].mxu0
    %v1106 = vadd.f32 0.0, %v1105
    %v1107 = vpop.f32.mrb[0].mxu0
    %1108 = vmatprep.mubr.f32.mxu0 0.0
    %1109 = vmatmul.mubr.f32.gmra.mrb[0].mxu0 %v1033
    %v1110 = vpop.f32.mrb[0].mxu0
    %v1111 = vadd.f32 0.0, %v1110
    %v1112 = vpop.f32.mrb[0].mxu0
    %1113 = vdwg.mxu0
    %v1114 = vmul.f32 %v1106, 0.35355338
    %v1115 = vmul.f32 %v1111, 0.35355338
    %v1116 = vadd.f32 %v1114, %v160
    %v1117 = vadd.f32 %v1115, %v161
    %v1118 = vsel %vm260, %v1116, -inf
    %1119 = vmax.xlane.f32.xlu0 %v1118
    %v1120 = vpop.xlane.xlu0 %1119
    %v1121 = vsel %vm260, %v1117, -inf
    %1122 = vmax.xlane.f32.xlu0 %v1121
    %v1123 = vpop.xlane.xlu0 %1122
    %v1124 = vsub.f32 %v1116, %v1120
    %v1125 = vsub.f32 %v1117, %v1123
    %v1126 = vmul.f32 %v1124, 1.442695
    %v1127 = vpow.pop %v1126
    %v1128 = vmul.f32 %v1125, 1.442695
    %v1129 = vpow.pop %v1128
    %v1130 = vsel %vm260, %v1127, 0.0
    %1131 = vadd.xlane.f32.xlu0 %v1130
    %v1132 = vpop.xlane.xlu0 %1131
    %v1133 = vsel %vm260, %v1129, 0.0
    %1134 = vadd.xlane.f32.xlu0 %v1133
    %v1135 = vpop.xlane.xlu0 %1134
    %1136 = vrot.lane.b32.xlu0 %v152, 40
    %v1137 = vpop.permute.xlu0 %1136
    %1138 = vrot.lane.b32.xlu0 %v157, 40
    %v1139 = vpop.permute.xlu0 %1138
    %v1143 = vsel %vm260, %v1127, 0
    %v1146 = vsel %vm260, %v1129, 0
    %1148 = vmatprep.subr.mxu0 0.0
    %1149 = vmatpush1.msra.mxu0 %v1137
    %1150 = vmatprep.subr.mxu0 0.0
    %1151 = vmatpush1.msra.mxu0 %v1139
    %1152 = vmatprep.subr.mxu0 0.0
    %1153 = vmatpush1.msra.mxu0 0.0
    %1154 = vmatprep.subr.mxu0 0.0
    %1155 = vmatpush1.msra.mxu0 0.0
    %1156 = vmatprep.subr.mxu0 0.0
    %1157 = vmatpush1.msra.mxu0 0.0
    %1158 = vmatprep.subr.mxu0 0.0
    %1159 = vmatpush1.msra.mxu0 0.0
    %1160 = vmatprep.subr.mxu0 0.0
    %1161 = vmatpush1.msra.mxu0 0.0
    %1162 = vmatprep.subr.mxu0 0.0
    %1163 = vmatpush1.msra.mxu0 0.0
    %1164 = vmatprep.subr.mxu0 0.0
    %1165 = vmatpush1.msra.mxu0 0.0
    %1166 = vmatprep.subr.mxu0 0.0
    %1167 = vmatpush1.msra.mxu0 0.0
    %1168 = vmatprep.subr.mxu0 0.0
    %1169 = vmatpush1.msra.mxu0 0.0
    %1170 = vmatprep.subr.mxu0 0.0
    %1171 = vmatpush1.msra.mxu0 0.0
    %1172 = vmatprep.subr.mxu0 0.0
    %1173 = vmatpush1.msra.mxu0 0.0
    %1174 = vmatprep.subr.mxu0 0.0
    %1175 = vmatpush1.msra.mxu0 0.0
    %1176 = vmatprep.subr.mxu0 0.0
    %1177 = vmatpush1.msra.mxu0 0.0
    %1178 = vmatprep.subr.mxu0 0.0
    %1179 = vmatpush1.msra.mxu0 0.0
    %1180 = vmatprep.subr.mxu0 0.0
    %1181 = vmatpush1.msra.mxu0 0.0
    %1182 = vmatprep.subr.mxu0 0.0
    %1183 = vmatpush1.msra.mxu0 0.0
    %1184 = vmatprep.subr.mxu0 0.0
    %1185 = vmatpush1.msra.mxu0 0.0
    %1186 = vmatprep.subr.mxu0 0.0
    %1187 = vmatpush1.msra.mxu0 0.0
    %1188 = vmatprep.subr.mxu0 0.0
    %1189 = vmatpush1.msra.mxu0 0.0
    %1190 = vmatprep.subr.mxu0 0.0
    %1191 = vmatpush1.msra.mxu0 0.0
    %1192 = vmatprep.subr.mxu0 0.0
    %1193 = vmatpush1.msra.mxu0 0.0
    %1194 = vmatprep.subr.mxu0 0.0
    %1195 = vmatpush1.msra.mxu0 0.0
    %1196 = vmatprep.subr.mxu0 0.0
    %1197 = vmatpush1.msra.mxu0 0.0
    %1198 = vmatprep.subr.mxu0 0.0
    %1199 = vmatpush1.msra.mxu0 0.0
    %1200 = vmatprep.subr.mxu0 0.0
    %1201 = vmatpush1.msra.mxu0 0.0
    %1202 = vmatprep.subr.mxu0 0.0
    %1203 = vmatpush1.msra.mxu0 0.0
    %1204 = vmatprep.subr.mxu0 0.0
    %1205 = vmatpush1.msra.mxu0 0.0
    %1206 = vmatprep.subr.mxu0 0.0
    %1207 = vmatpush1.msra.mxu0 0.0
    %1208 = vmatprep.subr.mxu0 0.0
    %1209 = vmatpush1.msra.mxu0 0.0
    %1210 = vmatprep.subr.mxu0 0.0
    %1211 = vmatpush1.msra.mxu0 0.0
    %1212 = vmatprep.mubr.f32.mxu0 0.0
    %1213 = vmatmul.mubr.f32.gmra.mrb[0].mxu0 %v1143
    %v1214 = vpop.f32.mrb[0].mxu0
    %v1215 = vadd.f32 0.0, %v1214
    %v1216 = vpop.f32.mrb[0].mxu0
    %1217 = vmatprep.mubr.f32.mxu0 0.0
    %1218 = vmatmul.mubr.f32.gmra.mrb[0].mxu0 %v1146
    %v1219 = vpop.f32.mrb[0].mxu0
    %v1220 = vadd.f32 0.0, %v1219
    %v1221 = vpop.f32.mrb[0].mxu0
    %1222 = vdwg.mxu0
    %v1223 = vrcp.pop %v1132
    %v1224 = vmul.f32 %v1215, %v1223
    %v1225 = vrcp.pop %v1135
    %v1226 = vmul.f32 %v1220, %v1225
    %v1228 = vsel %vm172, %v1224, 0
    %v1231 = vsel %vm172, %v1226, 0
    %1233 = vmatprep.subr.mxu0 0.0
    %1234 = vmatpush1.msra.mxu0 %v165
    %1235 = vmatprep.subr.mxu0 0.0
    %1236 = vmatpush1.msra.mxu0 0.0
    %1237 = vmatprep.subr.mxu0 0.0
    %1238 = vmatpush1.msra.mxu0 0.0
    %1239 = vmatprep.subr.mxu0 0.0
    %1240 = vmatpush1.msra.mxu0 0.0
    %1241 = vmatprep.subr.mxu0 0.0
    %1242 = vmatpush1.msra.mxu0 0.0
    %1243 = vmatprep.subr.mxu0 0.0
    %1244 = vmatpush1.msra.mxu0 0.0
    %1245 = vmatprep.subr.mxu0 0.0
    %1246 = vmatpush1.msra.mxu0 0.0
    %1247 = vmatprep.subr.mxu0 0.0
    %1248 = vmatpush1.msra.mxu0 0.0
    %1249 = vmatprep.subr.mxu0 0.0
    %1250 = vmatpush1.msra.mxu0 0.0
    %1251 = vmatprep.subr.mxu0 0.0
    %1252 = vmatpush1.msra.mxu0 0.0
    %1253 = vmatprep.subr.mxu0 0.0
    %1254 = vmatpush1.msra.mxu0 0.0
    %1255 = vmatprep.subr.mxu0 0.0
    %1256 = vmatpush1.msra.mxu0 0.0
    %1257 = vmatprep.subr.mxu0 0.0
    %1258 = vmatpush1.msra.mxu0 0.0
    %1259 = vmatprep.subr.mxu0 0.0
    %1260 = vmatpush1.msra.mxu0 0.0
    %1261 = vmatprep.subr.mxu0 0.0
    %1262 = vmatpush1.msra.mxu0 0.0
    %1263 = vmatprep.subr.mxu0 0.0
    %1264 = vmatpush1.msra.mxu0 0.0
    %1265 = vmatprep.subr.mxu0 0.0
    %1266 = vmatpush1.msra.mxu0 0.0
    %1267 = vmatprep.subr.mxu0 0.0
    %1268 = vmatpush1.msra.mxu0 0.0
    %1269 = vmatprep.subr.mxu0 0.0
    %1270 = vmatpush1.msra.mxu0 0.0
    %1271 = vmatprep.subr.mxu0 0.0
    %1272 = vmatpush1.msra.mxu0 0.0
    %1273 = vmatprep.subr.mxu0 0.0
    %1274 = vmatpush1.msra.mxu0 0.0
    %1275 = vmatprep.subr.mxu0 0.0
    %1276 = vmatpush1.msra.mxu0 0.0
    %1277 = vmatprep.subr.mxu0 0.0
    %1278 = vmatpush1.msra.mxu0 0.0
    %1279 = vmatprep.subr.mxu0 0.0
    %1280 = vmatpush1.msra.mxu0 0.0
    %1281 = vmatprep.subr.mxu0 0.0
    %1282 = vmatpush1.msra.mxu0 0.0
    %1283 = vmatprep.subr.mxu0 0.0
    %1284 = vmatpush1.msra.mxu0 0.0
    %1285 = vmatprep.subr.mxu0 0.0
    %1286 = vmatpush1.msra.mxu0 0.0
    %1287 = vmatprep.subr.mxu0 0.0
    %1288 = vmatpush1.msra.mxu0 0.0
    %1289 = vmatprep.subr.mxu0 0.0
    %1290 = vmatpush1.msra.mxu0 0.0
    %1291 = vmatprep.subr.mxu0 0.0
    %1292 = vmatpush1.msra.mxu0 0.0
    %1293 = vmatprep.subr.mxu0 0.0
    %1294 = vmatpush1.msra.mxu0 0.0
    %1295 = vmatprep.subr.mxu0 0.0
    %1296 = vmatpush1.msra.mxu0 0.0
    %1297 = vmatprep.mubr.f32.mxu0 0.0
    %1298 = vmatmul.mubr.f32.gmra.mrb[0].mxu0 %v1228
    %v1299 = vpop.f32.mrb[0].mxu0
    %v1300 = vadd.f32 0.0, %v1299
    %v1301 = vpop.f32.mrb[0].mxu0
    %1302 = vmatprep.mubr.f32.mxu0 0.0
    %1303 = vmatmul.mubr.f32.gmra.mrb[0].mxu0 %v1231
    %v1304 = vpop.f32.mrb[0].mxu0
    %v1305 = vadd.f32 0.0, %v1304
    %v1306 = vpop.f32.mrb[0].mxu0
    %1307 = vdwg.mxu0
    %v1308 = vadd.f32 %v1021, %v1300
    %v1309 = vadd.f32 %v1022, %v1305
    %v1310 = vld [vmem:[%s4] sm:$0x1]
    %v1312 = vlaneseq
    %v1313 = vshrl.u32 %v1312, 7
    %v1314 = vsub.s32 0, %v1313
    %v1315 = vrot.slane %v1310, %v1314
    %v1317 = vadd.f32 %v1308, %v1315
    %v1318 = vadd.f32 %v1309, %v1315
    %1319 = vst.msk [vmem:[#allocation8] sm:$0xff] %vm78, %v1317
    %1320 = vst.msk [vmem:[#allocation8 + $0x8] sm:$0xff] %vm78, %v1318
    // Predicated region
    $region38: #{tpu_custom_call.1} parent=1 // pred_check
      _
    $region39: #{tpu_custom_call.1} parent=1 // pred_check_branch
      %1322 = sbr.rel (0) target = $region41
    $region40: #{tpu_custom_call.1} parent=1 // pred_region
      %s1324 = ssub.s32 256, 256
      %1325 = vsyncadd [#allocation4], %s1324
      %s1326 = sshll.u32 [#allocation8], 4
      %s1327 = int_to_ptr.vmem [resolvable:$true] %s1326
      %1332 = dma.vmem_to_hbm [thread:$0]  %s1327, 256, %s6, [#allocation4], 128, 128, 8
    $region41: #{tpu_custom_call.1} parent=1 // pred_fallthru
      _
    // Predicated region
    $region42: #{tpu_custom_call.1} parent=1 // pred_check
      _
    $region43: #{tpu_custom_call.1} parent=1 // pred_check_branch
      %1334 = sbr.rel (0) target = $region45
    $region44: #{tpu_custom_call.1} parent=1 // pred_region
      %1335 = dma.done [#allocation4], 256
    $region45: #{tpu_custom_call.1} parent=1 // pred_fallthru
      _
    %1336 = vsyncpa [#allocation3], 1
    %1337 = vsyncpa [#allocation6], 1
    %1338 = vsyncpa [#allocation4], 1

</llo_original>
